<compile_context>
chip_gen: v6e
topology: v6e:2x2x1
jax: 0.10.0
libtpu: 0.0.40
codegen_flags: <defaults>
</compile_context>

<pallas_src>
import functools

import jax
import jax.numpy as jnp
from jax.experimental import pallas as pl
from jax.experimental.pallas import tpu as pltpu


_HIDDEN = 128          # conv1/conv2 width (from the module)
_NUM_CLASSES = 2       # conv3 width
_PADDED_CLASSES = 128  # lane-dense output width (extra classes masked to -inf)


def _round_up(n, m):
    return ((n + m - 1) // m) * m


def _vmem_capacity_bytes():
    try:
        return int(pltpu.get_tpu_info().vmem_capacity_bytes)
    except Exception:
        return 64 * 1024 * 1024  # conservative (v7x per-TensorCore)


def _clamp_vmem_limit(requested, cap):
    ceiling = max(cap - (16 << 20), 32 << 20)   # ~112 MiB v5e/v6e, 48 MiB v7x
    return int(min(max(requested, 32 << 20), ceiling))


def _fused_vmem_bytes(n_pad, hidden, padded):
    """Footprint of the fused resident-A path (A + live intermediates)."""
    return (2 * n_pad * n_pad                       # resident A (bf16)
            + 4 * n_pad * 128                       # x input ([N,1] f32, lane-padded)
            + 2 * 2 * n_pad * hidden                # xw1/xw2 bf16 scratch
            + 2 * n_pad * padded                    # bf16 output slab
            + 3 * 4 * n_pad * max(hidden, padded)   # f32 h2/h3/xw3 temporaries
            + 2 * hidden * (hidden + padded) + 4096)  # weights / biases


# ---------------------------------------------------------------------------
# Path A: single fused pallas_call, A streamed HBM->VMEM once and kept resident
# ---------------------------------------------------------------------------
def _edge_gcn_fused_kernel(x_ref, w1_ref, b1_ref, w2_ref, b2_ref, w3_ref,
                           b3_ref, a_hbm, o_ref,
                           a_vmem, xw1_ref, xw2_ref, sem, *, num_classes):
    nk, rc, _ = a_hbm.shape   # A passed as (nk, rc, Np) row chunks in HBM

    def chunk_copy(k):
        return pltpu.make_async_copy(
            a_hbm.at[k],
            a_vmem.at[pl.ds(k * rc, rc), :],
            sem.at[k % 2],
        )

    # Prime the pipeline: at most two row-chunk DMAs in flight.
    chunk_copy(0).start()
    if nk > 1:
        chunk_copy(1).start()

    # Layer-1 projection (K=1): VPU outer product via implicit broadcast with a
    # fused bf16 cast (no broadcast_to temporaries). Runs while DMAs land.
    xw1_ref[...] = (x_ref[...] * w1_ref[...]).astype(jnp.bfloat16)

    # ---- layer 1, streamed: each chunk fully produces its rows of
    #      xw2 = relu(A @ xw1 + b1) @ W2 while the next chunk's DMA runs.
    def stream_body(k, carry):
        off = pl.multiple_of(k * rc, rc)
        chunk_copy(k).wait()

        @pl.when(k + 2 < nk)
        def _():
            chunk_copy(k + 2).start()

        h1 = jnp.dot(a_vmem[pl.ds(off, rc), :], xw1_ref[...],
                     preferred_element_type=jnp.float32)
        h1 = jnp.maximum(h1 + b1_ref[...], 0.0).astype(jnp.bfloat16)
        xw2_ref[pl.ds(off, rc), :] = jnp.dot(
            h1, w2_ref[...], preferred_element_type=jnp.float32
        ).astype(jnp.bfloat16)
        return carry

    jax.lax.fori_loop(0, nk, stream_body, 0)

    # ---- layers 2 & 3 on the now-resident A (A crossed HBM exactly once).
    h2 = jnp.dot(a_vmem[...], xw2_ref[...], preferred_element_type=jnp.float32)
    h2 = jnp.maximum(h2 + b2_ref[...], 0.0)
    xw3 = jnp.dot(h2.astype(jnp.bfloat16), w3_ref[...],
                  preferred_element_type=jnp.float32).astype(jnp.bfloat16)

    h3 = jnp.dot(a_vmem[...], xw3, preferred_element_type=jnp.float32)
    h3 = jnp.maximum(h3 + b3_ref[...], 0.0)

    # Mask padded class lanes to -inf so they do not perturb log_softmax.
    col = jax.lax.broadcasted_iota(jnp.int32, h3.shape, 1)
    h3 = jnp.where(col < num_classes, h3, -jnp.inf)
    m = jnp.max(h3, axis=-1, keepdims=True)
    s = h3 - m
    lse = jnp.log(jnp.sum(jnp.exp(s), axis=-1, keepdims=True))
    o_ref[...] = (s - lse).astype(o_ref.dtype)


def _forward_fused(a_hat, x_pad, w1, b1, w2, b2, w3p, b3p, *, n_pad, hidden,
                   padded, n_cls, row_chunk, cap, fused_bytes):
    rc = row_chunk or (512 if n_pad % 512 == 0 else 256)
    assert n_pad % rc == 0
    nk = n_pad // rc
    a_chunks = a_hat.reshape(nk, rc, n_pad)   # free metadata reshape in XLA

    vmem_limit = _clamp_vmem_limit(int(fused_bytes * 1.3), cap)
    flops = (2 * n_pad * n_pad * (2 * hidden + padded)
             + 2 * n_pad * hidden * (hidden + padded) + n_pad * hidden)
    bytes_accessed = (2 * n_pad * n_pad + 4 * n_pad
                      + 2 * hidden * (hidden + padded)
                      + 2 * n_pad * padded)

    kernel = functools.partial(_edge_gcn_fused_kernel, num_classes=n_cls)
    vm = pl.BlockSpec(memory_space=pltpu.MemorySpace.VMEM)

    return pl.pallas_call(
        kernel,
        out_shape=jax.ShapeDtypeStruct((n_pad, padded), jnp.bfloat16),
        in_specs=[vm, vm, vm, vm, vm, vm, vm,
                  pl.BlockSpec(memory_space=pl.ANY)],   # A stays in HBM
        out_specs=vm,
        scratch_shapes=[
            pltpu.VMEM((n_pad, n_pad), jnp.bfloat16),   # resident A
            pltpu.VMEM((n_pad, hidden), jnp.bfloat16),  # xw1
            pltpu.VMEM((n_pad, hidden), jnp.bfloat16),  # xw2
            pltpu.SemaphoreType.DMA((2,)),
        ],
        compiler_params=pltpu.CompilerParams(vmem_limit_bytes=vmem_limit),
        cost_estimate=pl.CostEstimate(
            flops=flops,
            transcendentals=n_pad * (padded + 1),
            bytes_accessed=bytes_accessed),
    )(x_pad, w1, b1.reshape(1, hidden), w2.astype(jnp.bfloat16),
      b2.reshape(1, hidden), w3p.astype(jnp.bfloat16), b3p.reshape(1, padded),
      a_chunks)


# ---------------------------------------------------------------------------
# Path B: row-tiled multi-pass fallback (no N ceiling; both TCs on v7x)
# ---------------------------------------------------------------------------
def _gcn_layer_project_kernel(a_ref, p_ref, b_ref, wn_ref, o_ref, acc_ref):
    """out[i] = relu(A[i,:] @ p + b) @ W_next, accumulated over the K grid axis."""
    k = pl.program_id(1)

    @pl.when(k == 0)
    def _():
        acc_ref[...] = jnp.zeros_like(acc_ref)

    acc_ref[...] += jnp.dot(a_ref[...], p_ref[...],
                            preferred_element_type=jnp.float32)

    @pl.when(k == pl.num_programs(1) - 1)
    def _():
        h = jnp.maximum(acc_ref[...] + b_ref[...], 0.0).astype(jnp.bfloat16)
        o_ref[...] = jnp.dot(h, wn_ref[...],
                             preferred_element_type=jnp.float32
                             ).astype(o_ref.dtype)


def _gcn_layer_logsoftmax_kernel(a_ref, p_ref, b_ref, o_ref, acc_ref, *,
                                 num_classes):
    """out[i] = log_softmax(relu(A[i,:] @ p + b)) with padded classes masked."""
    k = pl.program_id(1)

    @pl.when(k == 0)
    def _():
        acc_ref[...] = jnp.zeros_like(acc_ref)

    acc_ref[...] += jnp.dot(a_ref[...], p_ref[...],
                            preferred_element_type=jnp.float32)

    @pl.when(k == pl.num_programs(1) - 1)
    def _():
        h = jnp.maximum(acc_ref[...] + b_ref[...], 0.0)
        col = jax.lax.broadcasted_iota(jnp.int32, h.shape, 1)
        h = jnp.where(col < num_classes, h, -jnp.inf)
        m = jnp.max(h, axis=-1, keepdims=True)
        s = h - m
        lse = jnp.log(jnp.sum(jnp.exp(s), axis=-1, keepdims=True))
        o_ref[...] = (s - lse).astype(o_ref.dtype)


def _forward_tiled(a_hat, x_pad, w1, b1, w2, b2, w3p, b3p, *, n_pad, hidden,
                   padded, n_cls, tm, tk, cap):
    tm = tm or (512 if n_pad % 512 == 0 else 256)
    tk = tk or 256
    assert n_pad % tm == 0 and n_pad % tk == 0

    # Layer-1 input projection (K=1) is a trivial outer product; plain JAX is
    # fine (negligible vs streaming A from HBM once per layer).
    p1 = (x_pad * w1.reshape(1, hidden)).astype(jnp.bfloat16)

    vmem_limit = _clamp_vmem_limit(
        2 * (2 * tm * tk)              # A blocks (bf16, double-buffered)
        + 2 * (2 * tk * hidden)        # p blocks
        + 2 * (2 * tm * padded)        # output blocks (bf16)
        + 4 * tm * padded              # f32 accumulator
        + 2 * hidden * padded + 4 * padded
        + (8 << 20),                   # headroom for compiler temporaries
        cap)

    def agg_project(p, b, wn):
        c_in = p.shape[1]
        c_out = wn.shape[1]
        return pl.pallas_call(
            _gcn_layer_project_kernel,
            out_shape=jax.ShapeDtypeStruct((n_pad, c_out), jnp.bfloat16),
            grid_spec=pltpu.PrefetchScalarGridSpec(
                num_scalar_prefetch=0,
                grid=(n_pad // tm, n_pad // tk),
                in_specs=[
                    pl.BlockSpec((tm, tk), lambda i, k: (i, k)),
                    pl.BlockSpec((tk, c_in), lambda i, k: (k, 0)),
                    pl.BlockSpec((1, c_in), lambda i, k: (0, 0)),     # pinned
                    pl.BlockSpec((c_in, c_out), lambda i, k: (0, 0)),  # pinned
                ],
                out_specs=pl.BlockSpec((tm, c_out), lambda i, k: (i, 0)),
                scratch_shapes=[pltpu.VMEM((tm, c_in), jnp.float32)],
            ),
            compiler_params=pltpu.CompilerParams(
                dimension_semantics=("parallel", "arbitrary"),
                vmem_limit_bytes=vmem_limit),
            cost_estimate=pl.CostEstimate(
                flops=2 * n_pad * n_pad * c_in + 2 * n_pad * c_in * c_out,
                transcendentals=0,
                bytes_accessed=2 * n_pad * n_pad + 2 * n_pad * (c_in + c_out)),
        )(a_hat, p, b, wn)

    def agg_logsoftmax(p, b):
        c_in = p.shape[1]
        return pl.pallas_call(
            functools.partial(_gcn_layer_logsoftmax_kernel, num_classes=n_cls),
            out_shape=jax.ShapeDtypeStruct((n_pad, c_in), jnp.bfloat16),
            grid_spec=pltpu.PrefetchScalarGridSpec(
                num_scalar_prefetch=0,
                grid=(n_pad // tm, n_pad // tk),
                in_specs=[
                    pl.BlockSpec((tm, tk), lambda i, k: (i, k)),
                    pl.BlockSpec((tk, c_in), lambda i, k: (k, 0)),
                    pl.BlockSpec((1, c_in), lambda i, k: (0, 0)),     # pinned
                ],
                out_specs=pl.BlockSpec((tm, c_in), lambda i, k: (i, 0)),
                scratch_shapes=[pltpu.VMEM((tm, c_in), jnp.float32)],
            ),
            compiler_params=pltpu.CompilerParams(
                dimension_semantics=("parallel", "arbitrary"),
                vmem_limit_bytes=vmem_limit),
            cost_estimate=pl.CostEstimate(
                flops=2 * n_pad * n_pad * c_in,
                transcendentals=n_pad * (c_in + 1),
                bytes_accessed=2 * n_pad * n_pad + 4 * n_pad * c_in),
        )(a_hat, p, b)

    z2 = agg_project(p1, b1.reshape(1, hidden), w2.astype(jnp.bfloat16))
    z3 = agg_project(z2, b2.reshape(1, hidden), w3p.astype(jnp.bfloat16))
    return agg_logsoftmax(z3, b3p.reshape(1, padded))


# ---------------------------------------------------------------------------
# Graph-setup glue (plain JAX) + wrapper
# ---------------------------------------------------------------------------
def gcn_norm_dense(edge_index, edge_weight, num_nodes):
    """Dense D^{-1/2}(A+I)D^{-1/2}, mirroring torch_geometric gcn_norm."""
    row = edge_index[0]
    col = edge_index[1]
    loop = jnp.arange(num_nodes, dtype=edge_index.dtype)
    row = jnp.concatenate([row, loop])
    col = jnp.concatenate([col, loop])
    ew = jnp.concatenate(
        [edge_weight, jnp.ones((num_nodes,), dtype=edge_weight.dtype)])
    deg = jnp.zeros((num_nodes,), dtype=ew.dtype).at[col].add(ew)
    deg_inv_sqrt = jnp.where(deg > 0, 1.0 / jnp.sqrt(deg), 0.0)
    norm = deg_inv_sqrt[row] * ew * deg_inv_sqrt[col]
    # out[dst] += norm * x[src]  =>  A[dst, src] += norm
    return jnp.zeros((num_nodes, num_nodes), dtype=ew.dtype).at[col, row].add(norm)


def init_params(key):
    """conv1: W [1,128]; conv2: W [128,128]; conv3: W [128,2] (+biases)."""
    dims = [(1, _HIDDEN), (_HIDDEN, _HIDDEN), (_HIDDEN, _NUM_CLASSES)]
    params = []
    for i, (fan_in, fan_out) in enumerate(dims):
        kw = jax.random.fold_in(key, 2 * i)
        kb = jax.random.fold_in(key, 2 * i + 1)
        scale = jnp.sqrt(2.0 / (fan_in + fan_out))
        w = scale * jax.random.normal(kw, (fan_in, fan_out), dtype=jnp.float32)
        b = 0.01 * jax.random.normal(kb, (fan_out,), dtype=jnp.float32)
        params.append((w, b))
    return params


def edge_gcn_forward(edge_index, edge_weight, params, *, force_tiled=False,
                     row_chunk=None, tm=None, tk=None):
    num_nodes = int(edge_weight.shape[0])  # module feeds edge_weight as node feats

    # JAX scatter drops out-of-range indices silently (torch would error).
    if int(jnp.max(edge_index)) >= num_nodes or int(jnp.min(edge_index)) < 0:
        raise ValueError("edge_index contains out-of-range node ids")

    (w1, b1), (w2, b2), (w3, b3) = params
    hidden = w1.shape[1]
    n_cls = w3.shape[1]
    padded = _PADDED_CLASSES

    # Pad N to a multiple of 256 (contraction-dim alignment for the 256-wide
    # MXU on v6e/v7x; also a multiple of 128 for v5e).
    n_pad = max(256, _round_up(num_nodes, 256))

    a_hat = gcn_norm_dense(edge_index, edge_weight, num_nodes)
    a_hat = jnp.pad(a_hat, ((0, n_pad - num_nodes), (0, n_pad - num_nodes)))
    a_hat = a_hat.astype(jnp.bfloat16)
    x_pad = jnp.zeros((n_pad, 1), jnp.float32).at[:num_nodes, 0].set(
        edge_weight.astype(jnp.float32))

    # conv3 weights/bias zero-padded to the lane-dense width.
    w3p = jnp.zeros((hidden, padded), jnp.float32).at[:, :n_cls].set(w3)
    b3p = jnp.zeros((padded,), jnp.float32).at[:n_cls].set(b3)

    cap = _vmem_capacity_bytes()
    fused_bytes = _fused_vmem_bytes(n_pad, hidden, padded)
    use_fused = (not force_tiled) and (
        fused_bytes <= int(0.8 * max(cap - (16 << 20), 32 << 20)))

    common = dict(n_pad=n_pad, hidden=hidden, padded=padded, n_cls=n_cls)
    if use_fused:
        out = _forward_fused(a_hat, x_pad, w1, b1, w2, b2, w3p, b3p,
                             row_chunk=row_chunk, cap=cap,
                             fused_bytes=fused_bytes, **common)
    else:
        out = _forward_tiled(a_hat, x_pad, w1, b1, w2, b2, w3p, b3p,
                             tm=tm, tk=tk, cap=cap, **common)
    return out[:num_nodes, :n_cls].astype(jnp.float32)


def edge_gcn_reference(edge_index, edge_weight, params):
    """Pure-JAX f32 reference of the module's forward."""
    n = edge_weight.shape[0]
    a = gcn_norm_dense(edge_index, edge_weight, n)
    h = edge_weight.reshape(n, 1).astype(jnp.float32)
    for w, b in params:
        h = a @ (h @ w) + b
        h = jnp.maximum(h, 0.0)
    return jax.nn.log_softmax(h, axis=1)


# ---------------------------------------------------------------------------
# Main
# ---------------------------------------------------------------------------
if __name__ == "__main__":
    key = jax.random.PRNGKey(0)
    params = init_params(jax.random.fold_in(key, 123))

    def make_graph(k, n):
        k_src, k_dst, k_w = jax.random.split(k, 3)
        src = jax.random.randint(k_src, (n,), 0, n, dtype=jnp.int32)
        dst = jax.random.randint(k_dst, (n,), 0, n, dtype=jnp.int32)
        ei = jnp.stack([src, dst], axis=0)                     # [2, E]
        ew = jax.random.uniform(k_w, (n,), dtype=jnp.float32)  # [E]
        return ei, ew

    # Small demo graph (the module uses edge_weight as node features -> N == E).
    ei_small, ew_small = make_graph(jax.random.fold_in(key, 0), 16)
    # Slightly larger graph: exercises the double-buffered A streaming (nk=3)
    # and a multi-tile (3,3) grid on the row-tiled fallback.
    ei_big, ew_big = make_graph(jax.random.fold_in(key, 1), 600)

    def check(out, edge_index, edge_weight, n):
        out = jax.block_until_ready(out)
        assert out.shape == (n, 2)
        assert bool(jnp.all(jnp.isfinite(out)))
        # rows of log_softmax should exp-sum to ~1 (bf16 path -> loose atol)
        assert bool(jnp.allclose(jnp.sum(jnp.exp(out), axis=1), 1.0, atol=5e-2))
        ref = edge_gcn_reference(edge_index, edge_weight, params)
        assert float(jnp.max(jnp.abs(out - ref))) < 1e-1

    # Fused resident-A path (auto-selected at these sizes).
    check(edge_gcn_forward(ei_small, ew_small, params), ei_small, ew_small, 16)
    check(edge_gcn_forward(ei_big, ew_big, params, row_chunk=256),
          ei_big, ew_big, 600)
    # Row-tiled multi-pass fallback (forced here; selected automatically when
    # the resident-A footprint exceeds the per-generation VMEM budget).
    check(edge_gcn_forward(ei_big, ew_big, params, force_tiled=True,
                           tm=256, tk=256),
          ei_big, ew_big, 600)

    print("KERNEL_OK")
</pallas_src>

<mosaic_0001>
module attributes {stable_mosaic.version = 11 : i64} {
  func.func @_edge_gcn_fused_kernel(%arg0: memref<256x1xf32, #tpu.memory_space<vmem>>, %arg1: memref<1x128xf32, #tpu.memory_space<vmem>>, %arg2: memref<1x128xf32, #tpu.memory_space<vmem>>, %arg3: memref<128x128xbf16, #tpu.memory_space<vmem>>, %arg4: memref<1x128xf32, #tpu.memory_space<vmem>>, %arg5: memref<128x128xbf16, #tpu.memory_space<vmem>>, %arg6: memref<1x128xf32, #tpu.memory_space<vmem>>, %arg7: memref<1x256x256xbf16, #tpu.memory_space<any>>, %arg8: memref<256x128xbf16, #tpu.memory_space<vmem>>, %arg9: memref<256x256xbf16, #tpu.memory_space<vmem>>, %arg10: memref<256x128xbf16, #tpu.memory_space<vmem>>, %arg11: memref<256x128xbf16, #tpu.memory_space<vmem>>, %arg12: memref<2x!tpu.dma_semaphore, #tpu.memory_space<semaphore_mem>>) attributes {dimension_semantics = [], scalar_prefetch = 0 : i64, scratch_operands = 4 : i64, tpu.core_type = #tpu.core_type<tc>} {
    %c0_i32 = arith.constant 0 : i32
    %c0_i32_0 = arith.constant 0 : i32
    %c0_i32_1 = arith.constant 0 : i32
    %c0_i32_2 = arith.constant 0 : i32
    %0 = tpu.memref_slice %arg7[%c0_i32, %c0_i32_1, %c0_i32_2] : memref<1x256x256xbf16, #tpu.memory_space<any>> -> memref<1x256x256xbf16, #tpu.memory_space<any>>
    %1 = tpu.memref_squeeze %0 : memref<1x256x256xbf16, #tpu.memory_space<any>> -> memref<256x256xbf16, #tpu.memory_space<any>>
    %c0_i32_3 = arith.constant 0 : i32
    %c0_i32_4 = arith.constant 0 : i32
    %2 = tpu.memref_slice %arg9[%c0_i32_3, %c0_i32_4] : memref<256x256xbf16, #tpu.memory_space<vmem>> -> memref<256x256xbf16, #tpu.memory_space<vmem>>
    %3 = tpu.memref_slice %arg12[%c0_i32_0] : memref<2x!tpu.dma_semaphore, #tpu.memory_space<semaphore_mem>> -> memref<1x!tpu.dma_semaphore, #tpu.memory_space<semaphore_mem>>
    %4 = tpu.memref_squeeze %3 : memref<1x!tpu.dma_semaphore, #tpu.memory_space<semaphore_mem>> -> memref<!tpu.dma_semaphore, #tpu.memory_space<semaphore_mem>>
    tpu.enqueue_dma source(%1 : memref<256x256xbf16, #tpu.memory_space<any>>) target(%2 : memref<256x256xbf16, #tpu.memory_space<vmem>>) target_semaphore(%4 : memref<!tpu.dma_semaphore, #tpu.memory_space<semaphore_mem>>)
    %c0 = arith.constant 0 : index
    %c0_5 = arith.constant 0 : index
    %5 = vector.load %arg0[%c0, %c0_5] : memref<256x1xf32, #tpu.memory_space<vmem>>, vector<256x1xf32>
    %c0_6 = arith.constant 0 : index
    %c0_7 = arith.constant 0 : index
    %6 = vector.load %arg1[%c0_6, %c0_7] : memref<1x128xf32, #tpu.memory_space<vmem>>, vector<1x128xf32>
    %7 = vector.broadcast %5 : vector<256x1xf32> to vector<256x128xf32>
    %8 = vector.broadcast %6 : vector<1x128xf32> to vector<256x128xf32>
    %9 = arith.mulf %7, %8 : vector<256x128xf32>
    %10 = arith.truncf %9 : vector<256x128xf32> to vector<256x128xbf16>
    %c0_8 = arith.constant 0 : index
    %c0_9 = arith.constant 0 : index
    %11 = vector.load %arg10[%c0_8, %c0_9] : memref<256x128xbf16, #tpu.memory_space<vmem>>, vector<256x128xbf16>
    tpu.vector_store %arg10[%c0_8, %c0_9], %10 {strides = array<i32>} : memref<256x128xbf16, #tpu.memory_space<vmem>>, vector<256x128xbf16>,
    %c0_i32_10 = arith.constant 0 : i32
    %c256_i32 = arith.constant 256 : i32
    %12 = arith.muli %c0_i32_10, %c256_i32 : i32
    %13 = tpu.assume_multiple %12, 256 : i32
    %c256_i32_11 = arith.constant 256 : i32
    %14 = arith.muli %c0_i32_10, %c256_i32_11 : i32
    %c2_i32 = arith.constant 2 : i32
    %c0_i32_12 = arith.constant 0 : i32
    %15 = arith.cmpi eq, %c2_i32, %c0_i32_12 : i32
    %c1_i32 = arith.constant 1 : i32
    %16 = arith.select %15, %c1_i32, %c2_i32 : i32
    %17 = arith.remsi %c0_i32_10, %16 : i32
    %c0_i32_13 = arith.constant 0 : i32
    %18 = arith.cmpi ne, %17, %c0_i32_13 : i32
    %c0_i32_14 = arith.constant 0 : i32
    %19 = arith.cmpi slt, %17, %c0_i32_14 : i32
    %c0_i32_15 = arith.constant 0 : i32
    %20 = arith.cmpi slt, %16, %c0_i32_15 : i32
    %21 = arith.xori %19, %20 : i1
    %22 = arith.andi %21, %18 : i1
    %23 = arith.addi %17, %16 : i32
    %24 = arith.select %22, %23, %17 : i32
    %c0_i32_16 = arith.constant 0 : i32
    %c0_i32_17 = arith.constant 0 : i32
    %25 = tpu.memref_slice %arg7[%c0_i32_10, %c0_i32_16, %c0_i32_17] : memref<1x256x256xbf16, #tpu.memory_space<any>> -> memref<1x256x256xbf16, #tpu.memory_space<any>>
    %26 = tpu.memref_squeeze %25 : memref<1x256x256xbf16, #tpu.memory_space<any>> -> memref<256x256xbf16, #tpu.memory_space<any>>
    %c0_i32_18 = arith.constant 0 : i32
    %27 = tpu.memref_slice %arg9[%14, %c0_i32_18] : memref<256x256xbf16, #tpu.memory_space<vmem>> -> memref<256x256xbf16, #tpu.memory_space<vmem>>
    %28 = tpu.memref_slice %arg12[%24] : memref<2x!tpu.dma_semaphore, #tpu.memory_space<semaphore_mem>> -> memref<1x!tpu.dma_semaphore, #tpu.memory_space<semaphore_mem>>
    %29 = tpu.memref_squeeze %28 : memref<1x!tpu.dma_semaphore, #tpu.memory_space<semaphore_mem>> -> memref<!tpu.dma_semaphore, #tpu.memory_space<semaphore_mem>>
    tpu.wait_dma2 semaphore(%29 : memref<!tpu.dma_semaphore, #tpu.memory_space<semaphore_mem>>) src(%26 : memref<256x256xbf16, #tpu.memory_space<any>>) dst(%27 : memref<256x256xbf16, #tpu.memory_space<vmem>>)
    %c2_i32_19 = arith.constant 2 : i32
    %30 = arith.addi %c0_i32_10, %c2_i32_19 : i32
    %c1_i32_20 = arith.constant 1 : i32
    %31 = arith.cmpi slt, %30, %c1_i32_20 : i32
    %32 = arith.extui %31 : i1 to i32
    %c0_i32_21 = arith.constant 0 : i32
    %33 = arith.cmpi ne, %32, %c0_i32_21 : i32
    scf.if %33 {
      %c2_i32_56 = arith.constant 2 : i32
      %85 = arith.addi %c0_i32_10, %c2_i32_56 : i32
      %c256_i32_57 = arith.constant 256 : i32
      %86 = arith.muli %85, %c256_i32_57 : i32
      %c2_i32_58 = arith.constant 2 : i32
      %c0_i32_59 = arith.constant 0 : i32
      %87 = arith.cmpi eq, %c2_i32_58, %c0_i32_59 : i32
      %c1_i32_60 = arith.constant 1 : i32
      %88 = arith.select %87, %c1_i32_60, %c2_i32_58 : i32
      %89 = arith.remsi %85, %88 : i32
      %c0_i32_61 = arith.constant 0 : i32
      %90 = arith.cmpi ne, %89, %c0_i32_61 : i32
      %c0_i32_62 = arith.constant 0 : i32
      %91 = arith.cmpi slt, %89, %c0_i32_62 : i32
      %c0_i32_63 = arith.constant 0 : i32
      %92 = arith.cmpi slt, %88, %c0_i32_63 : i32
      %93 = arith.xori %91, %92 : i1
      %94 = arith.andi %93, %90 : i1
      %95 = arith.addi %89, %88 : i32
      %96 = arith.select %94, %95, %89 : i32
      %c0_i32_64 = arith.constant 0 : i32
      %c0_i32_65 = arith.constant 0 : i32
      %97 = tpu.memref_slice %arg7[%85, %c0_i32_64, %c0_i32_65] : memref<1x256x256xbf16, #tpu.memory_space<any>> -> memref<1x256x256xbf16, #tpu.memory_space<any>>
      %98 = tpu.memref_squeeze %97 : memref<1x256x256xbf16, #tpu.memory_space<any>> -> memref<256x256xbf16, #tpu.memory_space<any>>
      %c0_i32_66 = arith.constant 0 : i32
      %99 = tpu.memref_slice %arg9[%86, %c0_i32_66] : memref<256x256xbf16, #tpu.memory_space<vmem>> -> memref<256x256xbf16, #tpu.memory_space<vmem>>
      %100 = tpu.memref_slice %arg12[%96] : memref<2x!tpu.dma_semaphore, #tpu.memory_space<semaphore_mem>> -> memref<1x!tpu.dma_semaphore, #tpu.memory_space<semaphore_mem>>
      %101 = tpu.memref_squeeze %100 : memref<1x!tpu.dma_semaphore, #tpu.memory_space<semaphore_mem>> -> memref<!tpu.dma_semaphore, #tpu.memory_space<semaphore_mem>>
      tpu.enqueue_dma source(%98 : memref<256x256xbf16, #tpu.memory_space<any>>) target(%99 : memref<256x256xbf16, #tpu.memory_space<vmem>>) target_semaphore(%101 : memref<!tpu.dma_semaphore, #tpu.memory_space<semaphore_mem>>)
    } else {
    }
    %34 = arith.index_cast %13 : i32 to index
    %c0_22 = arith.constant 0 : index
    %35 = vector.load %arg9[%34, %c0_22] : memref<256x256xbf16, #tpu.memory_space<vmem>>, vector<256x256xbf16>
    %c0_23 = arith.constant 0 : index
    %c0_24 = arith.constant 0 : index
    %36 = vector.load %arg10[%c0_23, %c0_24] : memref<256x128xbf16, #tpu.memory_space<vmem>>, vector<256x128xbf16>
    %cst = arith.constant dense<0.000000e+00> : vector<256x128xf32>
    %37 = tpu.matmul %35, %36, %cst {dimension_numbers = #tpu.dot_dimension_numbers<[1], [0], [0], [1], [0, 0, 1, 1], [], []>} : vector<256x256xbf16>, vector<256x128xbf16>, vector<256x128xf32> -> vector<256x128xf32>
    %c0_25 = arith.constant 0 : index
    %c0_26 = arith.constant 0 : index
    %38 = vector.load %arg2[%c0_25, %c0_26] : memref<1x128xf32, #tpu.memory_space<vmem>>, vector<1x128xf32>
    %39 = vector.broadcast %38 : vector<1x128xf32> to vector<256x128xf32>
    %40 = arith.addf %37, %39 : vector<256x128xf32>
    %cst_27 = arith.constant 0.000000e+00 : f32
    %41 = vector.broadcast %cst_27 : f32 to vector<256x128xf32>
    %42 = arith.maximumf %40, %41 : vector<256x128xf32>
    %43 = arith.truncf %42 : vector<256x128xf32> to vector<256x128xbf16>
    %c0_28 = arith.constant 0 : index
    %c0_29 = arith.constant 0 : index
    %44 = vector.load %arg3[%c0_28, %c0_29] : memref<128x128xbf16, #tpu.memory_space<vmem>>, vector<128x128xbf16>
    %cst_30 = arith.constant dense<0.000000e+00> : vector<256x128xf32>
    %45 = tpu.matmul %43, %44, %cst_30 {dimension_numbers = #tpu.dot_dimension_numbers<[1], [0], [0], [1], [0, 0, 1, 1], [], []>} : vector<256x128xbf16>, vector<128x128xbf16>, vector<256x128xf32> -> vector<256x128xf32>
    %46 = arith.truncf %45 : vector<256x128xf32> to vector<256x128xbf16>
    %47 = arith.index_cast %13 : i32 to index
    %c0_31 = arith.constant 0 : index
    %48 = vector.load %arg11[%47, %c0_31] : memref<256x128xbf16, #tpu.memory_space<vmem>>, vector<256x128xbf16>
    tpu.vector_store %arg11[%47, %c0_31], %46 {strides = array<i32>} : memref<256x128xbf16, #tpu.memory_space<vmem>>, vector<256x128xbf16>,
    %c1_i32_32 = arith.constant 1 : i32
    %c0_33 = arith.constant 0 : index
    %c0_34 = arith.constant 0 : index
    %49 = vector.load %arg9[%c0_33, %c0_34] : memref<256x256xbf16, #tpu.memory_space<vmem>>, vector<256x256xbf16>
    %c0_35 = arith.constant 0 : index
    %c0_36 = arith.constant 0 : index
    %50 = vector.load %arg11[%c0_35, %c0_36] : memref<256x128xbf16, #tpu.memory_space<vmem>>, vector<256x128xbf16>
    %cst_37 = arith.constant dense<0.000000e+00> : vector<256x128xf32>
    %51 = tpu.matmul %49, %50, %cst_37 {dimension_numbers = #tpu.dot_dimension_numbers<[1], [0], [0], [1], [0, 0, 1, 1], [], []>} : vector<256x256xbf16>, vector<256x128xbf16>, vector<256x128xf32> -> vector<256x128xf32>
    %c0_38 = arith.constant 0 : index
    %c0_39 = arith.constant 0 : index
    %52 = vector.load %arg4[%c0_38, %c0_39] : memref<1x128xf32, #tpu.memory_space<vmem>>, vector<1x128xf32>
    %53 = vector.broadcast %52 : vector<1x128xf32> to vector<256x128xf32>
    %54 = arith.addf %51, %53 : vector<256x128xf32>
    %cst_40 = arith.constant 0.000000e+00 : f32
    %55 = vector.broadcast %cst_40 : f32 to vector<256x128xf32>
    %56 = arith.maximumf %54, %55 : vector<256x128xf32>
    %57 = arith.truncf %56 : vector<256x128xf32> to vector<256x128xbf16>
    %c0_41 = arith.constant 0 : index
    %c0_42 = arith.constant 0 : index
    %58 = vector.load %arg5[%c0_41, %c0_42] : memref<128x128xbf16, #tpu.memory_space<vmem>>, vector<128x128xbf16>
    %cst_43 = arith.constant dense<0.000000e+00> : vector<256x128xf32>
    %59 = tpu.matmul %57, %58, %cst_43 {dimension_numbers = #tpu.dot_dimension_numbers<[1], [0], [0], [1], [0, 0, 1, 1], [], []>} : vector<256x128xbf16>, vector<128x128xbf16>, vector<256x128xf32> -> vector<256x128xf32>
    %60 = arith.truncf %59 : vector<256x128xf32> to vector<256x128xbf16>
    %c0_44 = arith.constant 0 : index
    %c0_45 = arith.constant 0 : index
    %61 = vector.load %arg9[%c0_44, %c0_45] : memref<256x256xbf16, #tpu.memory_space<vmem>>, vector<256x256xbf16>
    %cst_46 = arith.constant dense<0.000000e+00> : vector<256x128xf32>
    %62 = tpu.matmul %61, %60, %cst_46 {dimension_numbers = #tpu.dot_dimension_numbers<[1], [0], [0], [1], [0, 0, 1, 1], [], []>} : vector<256x256xbf16>, vector<256x128xbf16>, vector<256x128xf32> -> vector<256x128xf32>
    %c0_47 = arith.constant 0 : index
    %c0_48 = arith.constant 0 : index
    %63 = vector.load %arg6[%c0_47, %c0_48] : memref<1x128xf32, #tpu.memory_space<vmem>>, vector<1x128xf32>
    %64 = vector.broadcast %63 : vector<1x128xf32> to vector<256x128xf32>
    %65 = arith.addf %62, %64 : vector<256x128xf32>
    %cst_49 = arith.constant 0.000000e+00 : f32
    %66 = vector.broadcast %cst_49 : f32 to vector<256x128xf32>
    %67 = arith.maximumf %65, %66 : vector<256x128xf32>
    %68 = tpu.iota {dimensions = array<i32: 1>} : vector<256x128xi32>
    %c2_i32_50 = arith.constant 2 : i32
    %69 = vector.broadcast %c2_i32_50 : i32 to vector<256x128xi32>
    %70 = arith.cmpi slt, %68, %69 : vector<256x128xi32>
    %cst_51 = arith.constant 0xFF800000 : f32
    %71 = vector.broadcast %cst_51 : f32 to vector<256x128xf32>
    %72 = arith.select %70, %67, %71 : vector<256x128xi1>, vector<256x128xf32>
    %cst_52 = arith.constant dense<0xFF800000> : vector<256xf32>
    %73 = vector.multi_reduction <maximumf>, %72, %cst_52 [1] : vector<256x128xf32> to vector<256xf32>
    %74 = vector.shape_cast %73 : vector<256xf32> to vector<256x1xf32>
    %75 = vector.broadcast %74 : vector<256x1xf32> to vector<256x128xf32>
    %76 = arith.subf %72, %75 : vector<256x128xf32>
    %77 = math.exp %76 : vector<256x128xf32>
    %cst_53 = arith.constant dense<0.000000e+00> : vector<256xf32>
    %78 = vector.multi_reduction <add>, %77, %cst_53 [1] : vector<256x128xf32> to vector<256xf32>
    %79 = vector.shape_cast %78 : vector<256xf32> to vector<256x1xf32>
    %80 = math.log %79 : vector<256x1xf32>
    %81 = vector.broadcast %80 : vector<256x1xf32> to vector<256x128xf32>
    %82 = arith.subf %76, %81 : vector<256x128xf32>
    %83 = arith.truncf %82 : vector<256x128xf32> to vector<256x128xbf16>
    %c0_54 = arith.constant 0 : index
    %c0_55 = arith.constant 0 : index
    %84 = vector.load %arg8[%c0_54, %c0_55] : memref<256x128xbf16, #tpu.memory_space<vmem>>, vector<256x128xbf16>
    tpu.vector_store %arg8[%c0_54, %c0_55], %83 {strides = array<i32>} : memref<256x128xbf16, #tpu.memory_space<vmem>>, vector<256x128xbf16>,
    return
  }
}

</mosaic_0001>

<llo_original>
// kernel: tpu_custom_call.1
$region0: #{tpu_custom_call.1}
  #allocation0 [shape = 'u32[]', space=smem, size = 0x4, offset = 0x4, fixed_abs, tag = 'smem constant byte address 0x4 - core index']
  #allocation1 [shape = 'u32[144,128]{1,0:T(1,128)}', space=vmem, size = 0x12000, scoped, tag = 'internal scratch']
  #allocation2 [shape = 'bf16[256,256]{1,0:T(8,128)(2,1)}', space=vmem, size = 0x20000, scoped, tag = 'scratch operand']
  #allocation3 [shape = 'bf16[256,128]{1,0:T(8,128)(2,1)}', space=vmem, size = 0x10000, scoped, tag = 'scratch operand']
  #allocation4 [shape = 'bf16[256,128]{1,0:T(8,128)(2,1)}', space=vmem, size = 0x10000, scoped, tag = 'scratch operand']
  #allocation5 [shape = 's32[2]{0}', space=sflag, size = 0x8, scoped, tag = 'scratch operand']
  #allocation12 [shape = 's32[]', space=sflag, size = 0x4, offset = 0, fixed_abs, tag = 'sflag constant byte address 0x0 - dummy sync flag']
  %s0 = inlined_call_operand.vmem [shape: f32[256,1], index: 0, kind: input, shape index: {}]
  %s1 = inlined_call_operand.vmem [shape: f32[1,128], index: 1, kind: input, shape index: {}]
  %s2 = inlined_call_operand.vmem [shape: f32[1,128], index: 2, kind: input, shape index: {}]
  %s3 = inlined_call_operand.hbm [shape: bf16[128,128], index: 3, kind: input, shape index: {}]
  %s4 = inlined_call_operand.vmem [shape: f32[1,128], index: 4, kind: input, shape index: {}]
  %s5 = inlined_call_operand.hbm [shape: bf16[128,128], index: 5, kind: input, shape index: {}]
  %s6 = inlined_call_operand.vmem [shape: f32[1,128], index: 6, kind: input, shape index: {}]
  %s7 = inlined_call_operand.vmem [shape: bf16[1,256,256], index: 7, kind: input, shape index: {}]
  %s8 = inlined_call_operand.hbm [shape: bf16[256,128], index: 8, kind: output, shape index: {}]
  %s9 = sld [smem:[#allocation0]]
  $region80: #{tpu_custom_call.1} parent=0
    _
  %s11 = ssub.s32 1, %s9
  %s12 = scalar_select 0, %s11, %s9
  $region1: #{tpu_custom_call.1} parent=0
    #allocation6 [shape = 'u8[32768]{0}', space=vmem, size = 0x8000, scoped, tag = 'input window, operand 3, single buffered']
    #allocation7 [shape = 's32[1]{0}', space=sflag, size = 0x4, scoped, tag = 'scoped memory for tpu_custom_call.1']
    #allocation8 [shape = 's32[1]{0}', space=sflag, size = 0x4, scoped, tag = 'scoped memory for tpu_custom_call.1']
    #allocation9 [shape = 'u8[32768]{0}', space=vmem, size = 0x8000, scoped, tag = 'input window, operand 5, single buffered']
    #allocation10 [shape = 's32[1]{0}', space=sflag, size = 0x4, scoped, tag = 'scoped memory for tpu_custom_call.1']
    #allocation11 [shape = 'u8[65536]{0}', space=vmem, size = 0x10000, scoped, tag = 'output window, operand 0, single buffered']
    %13 = vsyncpa [#allocation7], 0
    %14 = vsyncpa [#allocation10], 0
    %15 = vsyncpa [#allocation8], 0
    // Predicated region
    $region2: #{tpu_custom_call.1} parent=1 // pred_check
      _
    $region3: #{tpu_custom_call.1} parent=1 // pred_check_branch
      %17 = sbr.rel (0) target = $region5
    $region4: #{tpu_custom_call.1} parent=1 // pred_region
      _
    $region5: #{tpu_custom_call.1} parent=1 // pred_fallthru
      _
    // Predicated region
    $region6: #{tpu_custom_call.1} parent=1 // pred_check
      _
    $region7: #{tpu_custom_call.1} parent=1 // pred_check_branch
      %19 = sbr.rel (0) target = $region9
    $region8: #{tpu_custom_call.1} parent=1 // pred_region
      _
    $region9: #{tpu_custom_call.1} parent=1 // pred_fallthru
      _
    // Predicated region
    $region10: #{tpu_custom_call.1} parent=1 // pred_check
      _
    $region11: #{tpu_custom_call.1} parent=1 // pred_check_branch
      %21 = sbr.rel (0) target = $region13
    $region12: #{tpu_custom_call.1} parent=1 // pred_region
      _
    $region13: #{tpu_custom_call.1} parent=1 // pred_fallthru
      _
    // Predicated region
    $region14: #{tpu_custom_call.1} parent=1 // pred_check
      _
    $region15: #{tpu_custom_call.1} parent=1 // pred_check_branch
      %23 = sbr.rel (0) target = $region17
    $region16: #{tpu_custom_call.1} parent=1 // pred_region
      %s25 = ssub.s32 1024, 1024
      %26 = vsyncadd [#allocation7], %s25
      %s27 = sshll.u32 [#allocation6], 4
      %s28 = int_to_ptr.vmem [resolvable:$true] %s27
      %33 = dma.hbm_to_vmem [thread:$0]  %s3, 1024, %s28, [#allocation7], 64, 64, 4
    $region17: #{tpu_custom_call.1} parent=1 // pred_fallthru
      _
    // Predicated region
    $region18: #{tpu_custom_call.1} parent=1 // pred_check
      _
    $region19: #{tpu_custom_call.1} parent=1 // pred_check_branch
      %35 = sbr.rel (0) target = $region21
    $region20: #{tpu_custom_call.1} parent=1 // pred_region
      _
    $region21: #{tpu_custom_call.1} parent=1 // pred_fallthru
      _
    // Predicated region
    $region22: #{tpu_custom_call.1} parent=1 // pred_check
      _
    $region23: #{tpu_custom_call.1} parent=1 // pred_check_branch
      %37 = sbr.rel (0) target = $region25
    $region24: #{tpu_custom_call.1} parent=1 // pred_region
      %s39 = ssub.s32 1024, 1024
      %40 = vsyncadd [#allocation10], %s39
      %s41 = sshll.u32 [#allocation9], 4
      %s42 = int_to_ptr.vmem [resolvable:$true] %s41
      %47 = dma.hbm_to_vmem [thread:$0]  %s5, 1024, %s42, [#allocation10], 64, 64, 4
    $region25: #{tpu_custom_call.1} parent=1 // pred_fallthru
      _
    // Predicated region
    $region26: #{tpu_custom_call.1} parent=1 // pred_check
      _
    $region27: #{tpu_custom_call.1} parent=1 // pred_check_branch
      %49 = sbr.rel (0) target = $region29
    $region28: #{tpu_custom_call.1} parent=1 // pred_region
      _
    $region29: #{tpu_custom_call.1} parent=1 // pred_fallthru
      _
    // Predicated region
    $region30: #{tpu_custom_call.1} parent=1 // pred_check
      _
    $region31: #{tpu_custom_call.1} parent=1 // pred_check_branch
      %51 = sbr.rel (0) target = $region33
    $region32: #{tpu_custom_call.1} parent=1 // pred_region
      %52 = dma.done [#allocation7], 1024
    $region33: #{tpu_custom_call.1} parent=1 // pred_fallthru
      _
    // Predicated region
    $region34: #{tpu_custom_call.1} parent=1 // pred_check
      _
    $region35: #{tpu_custom_call.1} parent=1 // pred_check_branch
      %54 = sbr.rel (0) target = $region37
    $region36: #{tpu_custom_call.1} parent=1 // pred_region
      %55 = dma.done [#allocation10], 1024
    $region37: #{tpu_custom_call.1} parent=1 // pred_fallthru
      _
    %p58 = scmp.lt.u32.totalorder 256, 8
    %p59 = pneg %p58
    // Predicated region
    $region38: #{tpu_custom_call.1} parent=1 // pred_check
      _
    $region39: #{tpu_custom_call.1} parent=1 // pred_check_branch
      %61 = sbr.rel (%p58) target = $region41
    $region40: #{tpu_custom_call.1} parent=1 // pred_region
      %s77 = sand.u32 256, 7
      %p78 = scmp.eq.s32.totalorder %s77, 0
      // Predicated region
      $region53: #{tpu_custom_call.1} parent=40 // pred_check
        %p79 = pneg %p78
      $region54: #{tpu_custom_call.1} parent=40 // pred_check_branch
        %81 = sbr.rel (%p79) target = $region56
      $region55: #{tpu_custom_call.1} parent=40 // pred_region
        loop: start=0, step=1, limit=1
        $region57: #{tpu_custom_call.1} parent=55 // loop_pre_header
          _
        $region58: #{tpu_custom_call.1} parent=55 // loop_header
          %s83 = sphi 0, %s87
          %p84 = scmp.ge.s32.totalorder %s83, 1
          %s88 = sphi %s7, %s7
          %s89 = sphi [#allocation2], [#allocation2]
        $region59: #{tpu_custom_call.1} parent=55 // loop_header_branch
          %86 = sbr.rel (%p84) target = $region63
        $region60: #{tpu_custom_call.1} parent=55 // loop_body
          %v90 = vld [vmem:[%s88] sm:$0xff]
          %91 = vst [vmem:[%s89] sm:$0xff] %v90
          %v92 = vld [vmem:[%s88 + $0x8] sm:$0xff]
          %93 = vst [vmem:[%s89 + $0x8] sm:$0xff] %v92
          %v94 = vld [vmem:[%s88 + $0x10] sm:$0xff]
          %95 = vst [vmem:[%s89 + $0x10] sm:$0xff] %v94
          %v96 = vld [vmem:[%s88 + $0x18] sm:$0xff]
          %97 = vst [vmem:[%s89 + $0x18] sm:$0xff] %v96
          %v98 = vld [vmem:[%s88 + $0x20] sm:$0xff]
          %99 = vst [vmem:[%s89 + $0x20] sm:$0xff] %v98
          %v100 = vld [vmem:[%s88 + $0x28] sm:$0xff]
          %101 = vst [vmem:[%s89 + $0x28] sm:$0xff] %v100
          %v102 = vld [vmem:[%s88 + $0x30] sm:$0xff]
          %103 = vst [vmem:[%s89 + $0x30] sm:$0xff] %v102
          %v104 = vld [vmem:[%s88 + $0x38] sm:$0xff]
          %105 = vst [vmem:[%s89 + $0x38] sm:$0xff] %v104
          %v106 = vld [vmem:[%s88 + $0x40] sm:$0xff]
          %107 = vst [vmem:[%s89 + $0x40] sm:$0xff] %v106
          %v108 = vld [vmem:[%s88 + $0x48] sm:$0xff]
          %109 = vst [vmem:[%s89 + $0x48] sm:$0xff] %v108
          %v110 = vld [vmem:[%s88 + $0x50] sm:$0xff]
          %111 = vst [vmem:[%s89 + $0x50] sm:$0xff] %v110
          %v112 = vld [vmem:[%s88 + $0x58] sm:$0xff]
          %113 = vst [vmem:[%s89 + $0x58] sm:$0xff] %v112
          %v114 = vld [vmem:[%s88 + $0x60] sm:$0xff]
          %115 = vst [vmem:[%s89 + $0x60] sm:$0xff] %v114
          %v116 = vld [vmem:[%s88 + $0x68] sm:$0xff]
          %117 = vst [vmem:[%s89 + $0x68] sm:$0xff] %v116
          %v118 = vld [vmem:[%s88 + $0x70] sm:$0xff]
          %119 = vst [vmem:[%s89 + $0x70] sm:$0xff] %v118
          %v120 = vld [vmem:[%s88 + $0x78] sm:$0xff]
          %121 = vst [vmem:[%s89 + $0x78] sm:$0xff] %v120
          %v122 = vld [vmem:[%s88 + $0x80] sm:$0xff]
          %123 = vst [vmem:[%s89 + $0x80] sm:$0xff] %v122
          %v124 = vld [vmem:[%s88 + $0x88] sm:$0xff]
          %125 = vst [vmem:[%s89 + $0x88] sm:$0xff] %v124
          %v126 = vld [vmem:[%s88 + $0x90] sm:$0xff]
          %127 = vst [vmem:[%s89 + $0x90] sm:$0xff] %v126
          %v128 = vld [vmem:[%s88 + $0x98] sm:$0xff]
          %129 = vst [vmem:[%s89 + $0x98] sm:$0xff] %v128
          %v130 = vld [vmem:[%s88 + $0xa0] sm:$0xff]
          %131 = vst [vmem:[%s89 + $0xa0] sm:$0xff] %v130
          %v132 = vld [vmem:[%s88 + $0xa8] sm:$0xff]
          %133 = vst [vmem:[%s89 + $0xa8] sm:$0xff] %v132
          %v134 = vld [vmem:[%s88 + $0xb0] sm:$0xff]
          %135 = vst [vmem:[%s89 + $0xb0] sm:$0xff] %v134
          %v136 = vld [vmem:[%s88 + $0xb8] sm:$0xff]
          %137 = vst [vmem:[%s89 + $0xb8] sm:$0xff] %v136
          %v138 = vld [vmem:[%s88 + $0xc0] sm:$0xff]
          %139 = vst [vmem:[%s89 + $0xc0] sm:$0xff] %v138
          %v140 = vld [vmem:[%s88 + $0xc8] sm:$0xff]
          %141 = vst [vmem:[%s89 + $0xc8] sm:$0xff] %v140
          %v142 = vld [vmem:[%s88 + $0xd0] sm:$0xff]
          %143 = vst [vmem:[%s89 + $0xd0] sm:$0xff] %v142
          %v144 = vld [vmem:[%s88 + $0xd8] sm:$0xff]
          %145 = vst [vmem:[%s89 + $0xd8] sm:$0xff] %v144
          %v146 = vld [vmem:[%s88 + $0xe0] sm:$0xff]
          %147 = vst [vmem:[%s89 + $0xe0] sm:$0xff] %v146
          %v148 = vld [vmem:[%s88 + $0xe8] sm:$0xff]
          %149 = vst [vmem:[%s89 + $0xe8] sm:$0xff] %v148
          %v150 = vld [vmem:[%s88 + $0xf0] sm:$0xff]
          %151 = vst [vmem:[%s89 + $0xf0] sm:$0xff] %v150
          %v152 = vld [vmem:[%s88 + $0xf8] sm:$0xff]
          %153 = vst [vmem:[%s89 + $0xf8] sm:$0xff] %v152
        $region61: #{tpu_custom_call.1} parent=55 // loop_footer
          %s87 = sadd.s32 1, %s83
        $region62: #{tpu_custom_call.1} parent=55 // loop_footer_branch
          %82 = sbr.rel target = $region58
        $region63: #{tpu_custom_call.1} parent=55 // loop_exit
          _
      $region56: #{tpu_custom_call.1} parent=40 // pred_fallthru
        _
      %p154 = pneg %p78
      // Predicated region
      $region64: #{tpu_custom_call.1} parent=40 // pred_check
        _
      $region65: #{tpu_custom_call.1} parent=40 // pred_check_branch
        %156 = sbr.rel (%p78) target = $region67
      $region66: #{tpu_custom_call.1} parent=40 // pred_region
        %s157 = sand.u32 256, 7
      $region67: #{tpu_custom_call.1} parent=40 // pred_fallthru
        _
    $region41: #{tpu_custom_call.1} parent=1 // pred_fallthru
      _
    // Predicated region
    $region42: #{tpu_custom_call.1} parent=1 // pred_check
      %p62 = pneg %p58
    $region43: #{tpu_custom_call.1} parent=1 // pred_check_branch
      %64 = sbr.rel (%p62) target = $region45
    $region44: #{tpu_custom_call.1} parent=1 // pred_region
      %s65 = sshll.u32 1, 256
      %s66 = ssub.s32 %s65, 1
      loop: start=0, step=1, limit=1
      $region46: #{tpu_custom_call.1} parent=44 // loop_pre_header
        _
      $region47: #{tpu_custom_call.1} parent=44 // loop_header
        %s68 = sphi 0, %s72
        %p69 = scmp.ge.s32.totalorder %s68, 1
        %s73 = sphi %s7, %s7
        %s74 = sphi [#allocation2], [#allocation2]
      $region48: #{tpu_custom_call.1} parent=44 // loop_header_branch
        %71 = sbr.rel (%p69) target = $region52
      $region49: #{tpu_custom_call.1} parent=44 // loop_body
        %v75 = vld [vmem:[%s73] sm:%s66]
        %76 = vst [vmem:[%s74] sm:%s66] %v75
      $region50: #{tpu_custom_call.1} parent=44 // loop_footer
        %s72 = sadd.s32 1, %s68
      $region51: #{tpu_custom_call.1} parent=44 // loop_footer_branch
        %67 = sbr.rel target = $region47
      $region52: #{tpu_custom_call.1} parent=44 // loop_exit
        _
    $region45: #{tpu_custom_call.1} parent=1 // pred_fallthru
      _
    // Predicated region
    $region68: #{tpu_custom_call.1} parent=1 // pred_check
      _
    $region69: #{tpu_custom_call.1} parent=1 // pred_check_branch
      %160 = sbr.rel (0) target = $region71
    $region70: #{tpu_custom_call.1} parent=1 // pred_region
      %161 = vsyncadd [#allocation5], 4096
    $region71: #{tpu_custom_call.1} parent=1 // pred_fallthru
      _
    %v162 = vld [vmem:[%s0] sm:$0xff]
    %v163 = vld [vmem:[%s0 + $0x8] sm:$0xff]
    %v164 = vld [vmem:[%s0 + $0x10] sm:$0xff]
    %v165 = vld [vmem:[%s0 + $0x18] sm:$0xff]
    %v166 = vld [vmem:[%s0 + $0x20] sm:$0xff]
    %v167 = vld [vmem:[%s0 + $0x28] sm:$0xff]
    %v168 = vld [vmem:[%s0 + $0x30] sm:$0xff]
    %v169 = vld [vmem:[%s0 + $0x38] sm:$0xff]
    %v170 = vld [vmem:[%s0 + $0x40] sm:$0xff]
    %v171 = vld [vmem:[%s0 + $0x48] sm:$0xff]
    %v172 = vld [vmem:[%s0 + $0x50] sm:$0xff]
    %v173 = vld [vmem:[%s0 + $0x58] sm:$0xff]
    %v174 = vld [vmem:[%s0 + $0x60] sm:$0xff]
    %v175 = vld [vmem:[%s0 + $0x68] sm:$0xff]
    %v176 = vld [vmem:[%s0 + $0x70] sm:$0xff]
    %v177 = vld [vmem:[%s0 + $0x78] sm:$0xff]
    %v178 = vld [vmem:[%s0 + $0x80] sm:$0xff]
    %v179 = vld [vmem:[%s0 + $0x88] sm:$0xff]
    %v180 = vld [vmem:[%s0 + $0x90] sm:$0xff]
    %v181 = vld [vmem:[%s0 + $0x98] sm:$0xff]
    %v182 = vld [vmem:[%s0 + $0xa0] sm:$0xff]
    %v183 = vld [vmem:[%s0 + $0xa8] sm:$0xff]
    %v184 = vld [vmem:[%s0 + $0xb0] sm:$0xff]
    %v185 = vld [vmem:[%s0 + $0xb8] sm:$0xff]
    %v186 = vld [vmem:[%s0 + $0xc0] sm:$0xff]
    %v187 = vld [vmem:[%s0 + $0xc8] sm:$0xff]
    %v188 = vld [vmem:[%s0 + $0xd0] sm:$0xff]
    %v189 = vld [vmem:[%s0 + $0xd8] sm:$0xff]
    %v190 = vld [vmem:[%s0 + $0xe0] sm:$0xff]
    %v191 = vld [vmem:[%s0 + $0xe8] sm:$0xff]
    %v192 = vld [vmem:[%s0 + $0xf0] sm:$0xff]
    %v193 = vld [vmem:[%s0 + $0xf8] sm:$0xff]
    %v194 = vld [vmem:[%s1] sm:$0x1]
    %196 = vset.pattern.permute.xlu0 0
    %197 = vperm.xlu0 %196, %v162
    %v198 = vpop.permute.xlu0 %197
    %201 = vset.pattern.permute.xlu0 0
    %202 = vperm.xlu0 %201, %v163
    %v203 = vpop.permute.xlu0 %202
    %206 = vset.pattern.permute.xlu0 0
    %207 = vperm.xlu0 %206, %v164
    %v208 = vpop.permute.xlu0 %207
    %211 = vset.pattern.permute.xlu0 0
    %212 = vperm.xlu0 %211, %v165
    %v213 = vpop.permute.xlu0 %212
    %216 = vset.pattern.permute.xlu0 0
    %217 = vperm.xlu0 %216, %v166
    %v218 = vpop.permute.xlu0 %217
    %221 = vset.pattern.permute.xlu0 0
    %222 = vperm.xlu0 %221, %v167
    %v223 = vpop.permute.xlu0 %222
    %226 = vset.pattern.permute.xlu0 0
    %227 = vperm.xlu0 %226, %v168
    %v228 = vpop.permute.xlu0 %227
    %231 = vset.pattern.permute.xlu0 0
    %232 = vperm.xlu0 %231, %v169
    %v233 = vpop.permute.xlu0 %232
    %236 = vset.pattern.permute.xlu0 0
    %237 = vperm.xlu0 %236, %v170
    %v238 = vpop.permute.xlu0 %237
    %241 = vset.pattern.permute.xlu0 0
    %242 = vperm.xlu0 %241, %v171
    %v243 = vpop.permute.xlu0 %242
    %246 = vset.pattern.permute.xlu0 0
    %247 = vperm.xlu0 %246, %v172
    %v248 = vpop.permute.xlu0 %247
    %251 = vset.pattern.permute.xlu0 0
    %252 = vperm.xlu0 %251, %v173
    %v253 = vpop.permute.xlu0 %252
    %256 = vset.pattern.permute.xlu0 0
    %257 = vperm.xlu0 %256, %v174
    %v258 = vpop.permute.xlu0 %257
    %261 = vset.pattern.permute.xlu0 0
    %262 = vperm.xlu0 %261, %v175
    %v263 = vpop.permute.xlu0 %262
    %266 = vset.pattern.permute.xlu0 0
    %267 = vperm.xlu0 %266, %v176
    %v268 = vpop.permute.xlu0 %267
    %271 = vset.pattern.permute.xlu0 0
    %272 = vperm.xlu0 %271, %v177
    %v273 = vpop.permute.xlu0 %272
    %276 = vset.pattern.permute.xlu0 0
    %277 = vperm.xlu0 %276, %v178
    %v278 = vpop.permute.xlu0 %277
    %281 = vset.pattern.permute.xlu0 0
    %282 = vperm.xlu0 %281, %v179
    %v283 = vpop.permute.xlu0 %282
    %286 = vset.pattern.permute.xlu0 0
    %287 = vperm.xlu0 %286, %v180
    %v288 = vpop.permute.xlu0 %287
    %291 = vset.pattern.permute.xlu0 0
    %292 = vperm.xlu0 %291, %v181
    %v293 = vpop.permute.xlu0 %292
    %296 = vset.pattern.permute.xlu0 0
    %297 = vperm.xlu0 %296, %v182
    %v298 = vpop.permute.xlu0 %297
    %301 = vset.pattern.permute.xlu0 0
    %302 = vperm.xlu0 %301, %v183
    %v303 = vpop.permute.xlu0 %302
    %306 = vset.pattern.permute.xlu0 0
    %307 = vperm.xlu0 %306, %v184
    %v308 = vpop.permute.xlu0 %307
    %311 = vset.pattern.permute.xlu0 0
    %312 = vperm.xlu0 %311, %v185
    %v313 = vpop.permute.xlu0 %312
    %316 = vset.pattern.permute.xlu0 0
    %317 = vperm.xlu0 %316, %v186
    %v318 = vpop.permute.xlu0 %317
    %321 = vset.pattern.permute.xlu0 0
    %322 = vperm.xlu0 %321, %v187
    %v323 = vpop.permute.xlu0 %322
    %326 = vset.pattern.permute.xlu0 0
    %327 = vperm.xlu0 %326, %v188
    %v328 = vpop.permute.xlu0 %327
    %331 = vset.pattern.permute.xlu0 0
    %332 = vperm.xlu0 %331, %v189
    %v333 = vpop.permute.xlu0 %332
    %336 = vset.pattern.permute.xlu0 0
    %337 = vperm.xlu0 %336, %v190
    %v338 = vpop.permute.xlu0 %337
    %341 = vset.pattern.permute.xlu0 0
    %342 = vperm.xlu0 %341, %v191
    %v343 = vpop.permute.xlu0 %342
    %346 = vset.pattern.permute.xlu0 0
    %347 = vperm.xlu0 %346, %v192
    %v348 = vpop.permute.xlu0 %347
    %351 = vset.pattern.permute.xlu0 0
    %352 = vperm.xlu0 %351, %v193
    %v353 = vpop.permute.xlu0 %352
    %v356 = vlaneseq
    %v357 = vshrl.u32 %v356, 7
    %v358 = vsub.s32 0, %v357
    %v359 = vrot.slane %v194, %v358
    %v361 = vmul.f32 %v198, %v359
    %v362 = vmul.f32 %v203, %v359
    %v363 = vmul.f32 %v208, %v359
    %v364 = vmul.f32 %v213, %v359
    %v365 = vmul.f32 %v218, %v359
    %v366 = vmul.f32 %v223, %v359
    %v367 = vmul.f32 %v228, %v359
    %v368 = vmul.f32 %v233, %v359
    %v369 = vmul.f32 %v238, %v359
    %v370 = vmul.f32 %v243, %v359
    %v371 = vmul.f32 %v248, %v359
    %v372 = vmul.f32 %v253, %v359
    %v373 = vmul.f32 %v258, %v359
    %v374 = vmul.f32 %v263, %v359
    %v375 = vmul.f32 %v268, %v359
    %v376 = vmul.f32 %v273, %v359
    %v377 = vmul.f32 %v278, %v359
    %v378 = vmul.f32 %v283, %v359
    %v379 = vmul.f32 %v288, %v359
    %v380 = vmul.f32 %v293, %v359
    %v381 = vmul.f32 %v298, %v359
    %v382 = vmul.f32 %v303, %v359
    %v383 = vmul.f32 %v308, %v359
    %v384 = vmul.f32 %v313, %v359
    %v385 = vmul.f32 %v318, %v359
    %v386 = vmul.f32 %v323, %v359
    %v387 = vmul.f32 %v328, %v359
    %v388 = vmul.f32 %v333, %v359
    %v389 = vmul.f32 %v338, %v359
    %v390 = vmul.f32 %v343, %v359
    %v391 = vmul.f32 %v348, %v359
    %v392 = vmul.f32 %v353, %v359
    %v393 = vpack.c.bf16 %v362, %v361
    %v394 = vpack.c.bf16 %v364, %v363
    %v395 = vpack.c.bf16 %v366, %v365
    %v396 = vpack.c.bf16 %v368, %v367
    %v397 = vpack.c.bf16 %v370, %v369
    %v398 = vpack.c.bf16 %v372, %v371
    %v399 = vpack.c.bf16 %v374, %v373
    %v400 = vpack.c.bf16 %v376, %v375
    %v401 = vpack.c.bf16 %v378, %v377
    %v402 = vpack.c.bf16 %v380, %v379
    %v403 = vpack.c.bf16 %v382, %v381
    %v404 = vpack.c.bf16 %v384, %v383
    %v405 = vpack.c.bf16 %v386, %v385
    %v406 = vpack.c.bf16 %v388, %v387
    %v407 = vpack.c.bf16 %v390, %v389
    %v408 = vpack.c.bf16 %v392, %v391
    %v425 = vunpack.c.l.b16 %v393
    %v426 = vunpack.c.h.b16 %v393
    %v427 = vunpack.c.l.b16 %v394
    %v428 = vunpack.c.h.b16 %v394
    %v429 = vunpack.c.l.b16 %v395
    %v430 = vunpack.c.h.b16 %v395
    %v431 = vunpack.c.l.b16 %v396
    %v432 = vunpack.c.h.b16 %v396
    %v433 = vunpack.c.l.b16 %v397
    %v434 = vunpack.c.h.b16 %v397
    %v435 = vunpack.c.l.b16 %v398
    %v436 = vunpack.c.h.b16 %v398
    %v437 = vunpack.c.l.b16 %v399
    %v438 = vunpack.c.h.b16 %v399
    %v439 = vunpack.c.l.b16 %v400
    %v440 = vunpack.c.h.b16 %v400
    %v441 = vunpack.c.l.b16 %v401
    %v442 = vunpack.c.h.b16 %v401
    %v443 = vunpack.c.l.b16 %v402
    %v444 = vunpack.c.h.b16 %v402
    %v445 = vunpack.c.l.b16 %v403
    %v446 = vunpack.c.h.b16 %v403
    %v447 = vunpack.c.l.b16 %v404
    %v448 = vunpack.c.h.b16 %v404
    %v449 = vunpack.c.l.b16 %v405
    %v450 = vunpack.c.h.b16 %v405
    %v451 = vunpack.c.l.b16 %v406
    %v452 = vunpack.c.h.b16 %v406
    %v453 = vunpack.c.l.b16 %v407
    %v454 = vunpack.c.h.b16 %v407
    %v455 = vunpack.c.l.b16 %v408
    %v456 = vunpack.c.h.b16 %v408
    %v457 = vpack.c.b16 %v425, %v425
    %v458 = vpack.c.b16 %v426, %v426
    %v459 = vpack.c.b16 %v427, %v427
    %v460 = vpack.c.b16 %v428, %v428
    %v461 = vpack.c.b16 %v429, %v429
    %v462 = vpack.c.b16 %v430, %v430
    %v463 = vpack.c.b16 %v431, %v431
    %v464 = vpack.c.b16 %v432, %v432
    %v465 = vpack.c.b16 %v433, %v433
    %v466 = vpack.c.b16 %v434, %v434
    %v467 = vpack.c.b16 %v435, %v435
    %v468 = vpack.c.b16 %v436, %v436
    %v469 = vpack.c.b16 %v437, %v437
    %v470 = vpack.c.b16 %v438, %v438
    %v471 = vpack.c.b16 %v439, %v439
    %v472 = vpack.c.b16 %v440, %v440
    %v473 = vpack.c.b16 %v441, %v441
    %v474 = vpack.c.b16 %v442, %v442
    %v475 = vpack.c.b16 %v443, %v443
    %v476 = vpack.c.b16 %v444, %v444
    %v477 = vpack.c.b16 %v445, %v445
    %v478 = vpack.c.b16 %v446, %v446
    %v479 = vpack.c.b16 %v447, %v447
    %v480 = vpack.c.b16 %v448, %v448
    %v481 = vpack.c.b16 %v449, %v449
    %v482 = vpack.c.b16 %v450, %v450
    %v483 = vpack.c.b16 %v451, %v451
    %v484 = vpack.c.b16 %v452, %v452
    %v485 = vpack.c.b16 %v453, %v453
    %v486 = vpack.c.b16 %v454, %v454
    %v487 = vpack.c.b16 %v455, %v455
    %v488 = vpack.c.b16 %v456, %v456
    %521 = vst [vmem:[#allocation3] sm:$0xf] %v457
    %522 = vst [vmem:[#allocation3 + $0x4] sm:$0xf] %v458
    %523 = vst [vmem:[#allocation3 + $0x8] sm:$0xf] %v459
    %524 = vst [vmem:[#allocation3 + $0xc] sm:$0xf] %v460
    %525 = vst [vmem:[#allocation3 + $0x10] sm:$0xf] %v461
    %526 = vst [vmem:[#allocation3 + $0x14] sm:$0xf] %v462
    %527 = vst [vmem:[#allocation3 + $0x18] sm:$0xf] %v463
    %528 = vst [vmem:[#allocation3 + $0x1c] sm:$0xf] %v464
    %529 = vst [vmem:[#allocation3 + $0x20] sm:$0xf] %v465
    %530 = vst [vmem:[#allocation3 + $0x24] sm:$0xf] %v466
    %531 = vst [vmem:[#allocation3 + $0x28] sm:$0xf] %v467
    %532 = vst [vmem:[#allocation3 + $0x2c] sm:$0xf] %v468
    %533 = vst [vmem:[#allocation3 + $0x30] sm:$0xf] %v469
    %534 = vst [vmem:[#allocation3 + $0x34] sm:$0xf] %v470
    %535 = vst [vmem:[#allocation3 + $0x38] sm:$0xf] %v471
    %536 = vst [vmem:[#allocation3 + $0x3c] sm:$0xf] %v472
    %537 = vst [vmem:[#allocation3 + $0x40] sm:$0xf] %v473
    %538 = vst [vmem:[#allocation3 + $0x44] sm:$0xf] %v474
    %539 = vst [vmem:[#allocation3 + $0x48] sm:$0xf] %v475
    %540 = vst [vmem:[#allocation3 + $0x4c] sm:$0xf] %v476
    %541 = vst [vmem:[#allocation3 + $0x50] sm:$0xf] %v477
    %542 = vst [vmem:[#allocation3 + $0x54] sm:$0xf] %v478
    %543 = vst [vmem:[#allocation3 + $0x58] sm:$0xf] %v479
    %544 = vst [vmem:[#allocation3 + $0x5c] sm:$0xf] %v480
    %545 = vst [vmem:[#allocation3 + $0x60] sm:$0xf] %v481
    %546 = vst [vmem:[#allocation3 + $0x64] sm:$0xf] %v482
    %547 = vst [vmem:[#allocation3 + $0x68] sm:$0xf] %v483
    %548 = vst [vmem:[#allocation3 + $0x6c] sm:$0xf] %v484
    %549 = vst [vmem:[#allocation3 + $0x70] sm:$0xf] %v485
    %550 = vst [vmem:[#allocation3 + $0x74] sm:$0xf] %v486
    %551 = vst [vmem:[#allocation3 + $0x78] sm:$0xf] %v487
    %552 = vst [vmem:[#allocation3 + $0x7c] sm:$0xf] %v488
    %s553 = smul.u32 4, 32
    %s554 = smul.u32 %s553, 2
    %s555 = sshll.u32 %s554, 4
    %556 = dma.done [#allocation5], %s555
    %s557 = smul.u32 0, 2
    %s558 = smul.addr %s557, 4
    %s559 = scalar_lea.vmem [#allocation2], %s558
    %v560 = vld [vmem:[%s559] sm:$0xff]
    %v561 = vld [vmem:[%s559 + $0x8] sm:$0xff]
    %v562 = vld [vmem:[%s559 + $0x10] sm:$0xff]
    %v563 = vld [vmem:[%s559 + $0x18] sm:$0xff]
    %v564 = vld [vmem:[%s559 + $0x20] sm:$0xff]
    %v565 = vld [vmem:[%s559 + $0x28] sm:$0xff]
    %v566 = vld [vmem:[%s559 + $0x30] sm:$0xff]
    %v567 = vld [vmem:[%s559 + $0x38] sm:$0xff]
    %v568 = vld [vmem:[%s559 + $0x40] sm:$0xff]
    %v569 = vld [vmem:[%s559 + $0x48] sm:$0xff]
    %v570 = vld [vmem:[%s559 + $0x50] sm:$0xff]
    %v571 = vld [vmem:[%s559 + $0x58] sm:$0xff]
    %v572 = vld [vmem:[%s559 + $0x60] sm:$0xff]
    %v573 = vld [vmem:[%s559 + $0x68] sm:$0xff]
    %v574 = vld [vmem:[%s559 + $0x70] sm:$0xff]
    %v575 = vld [vmem:[%s559 + $0x78] sm:$0xff]
    %v576 = vld [vmem:[%s559 + $0x80] sm:$0xff]
    %v577 = vld [vmem:[%s559 + $0x88] sm:$0xff]
    %v578 = vld [vmem:[%s559 + $0x90] sm:$0xff]
    %v579 = vld [vmem:[%s559 + $0x98] sm:$0xff]
    %v580 = vld [vmem:[%s559 + $0xa0] sm:$0xff]
    %v581 = vld [vmem:[%s559 + $0xa8] sm:$0xff]
    %v582 = vld [vmem:[%s559 + $0xb0] sm:$0xff]
    %v583 = vld [vmem:[%s559 + $0xb8] sm:$0xff]
    %v584 = vld [vmem:[%s559 + $0xc0] sm:$0xff]
    %v585 = vld [vmem:[%s559 + $0xc8] sm:$0xff]
    %v586 = vld [vmem:[%s559 + $0xd0] sm:$0xff]
    %v587 = vld [vmem:[%s559 + $0xd8] sm:$0xff]
    %v588 = vld [vmem:[%s559 + $0xe0] sm:$0xff]
    %v589 = vld [vmem:[%s559 + $0xe8] sm:$0xff]
    %v590 = vld [vmem:[%s559 + $0xf0] sm:$0xff]
    %v591 = vld [vmem:[%s559 + $0xf8] sm:$0xff]
    %v592 = vld [vmem:[#allocation3] sm:$0xf]
    %v593 = vld [vmem:[#allocation3 + $0x4] sm:$0xf]
    %v594 = vld [vmem:[#allocation3 + $0x8] sm:$0xf]
    %v595 = vld [vmem:[#allocation3 + $0xc] sm:$0xf]
    %v596 = vld [vmem:[#allocation3 + $0x10] sm:$0xf]
    %v597 = vld [vmem:[#allocation3 + $0x14] sm:$0xf]
    %v598 = vld [vmem:[#allocation3 + $0x18] sm:$0xf]
    %v599 = vld [vmem:[#allocation3 + $0x1c] sm:$0xf]
    %v600 = vld [vmem:[#allocation3 + $0x20] sm:$0xf]
    %v601 = vld [vmem:[#allocation3 + $0x24] sm:$0xf]
    %v602 = vld [vmem:[#allocation3 + $0x28] sm:$0xf]
    %v603 = vld [vmem:[#allocation3 + $0x2c] sm:$0xf]
    %v604 = vld [vmem:[#allocation3 + $0x30] sm:$0xf]
    %v605 = vld [vmem:[#allocation3 + $0x34] sm:$0xf]
    %v606 = vld [vmem:[#allocation3 + $0x38] sm:$0xf]
    %v607 = vld [vmem:[#allocation3 + $0x3c] sm:$0xf]
    %v608 = vld [vmem:[#allocation3 + $0x40] sm:$0xf]
    %v609 = vld [vmem:[#allocation3 + $0x44] sm:$0xf]
    %v610 = vld [vmem:[#allocation3 + $0x48] sm:$0xf]
    %v611 = vld [vmem:[#allocation3 + $0x4c] sm:$0xf]
    %v612 = vld [vmem:[#allocation3 + $0x50] sm:$0xf]
    %v613 = vld [vmem:[#allocation3 + $0x54] sm:$0xf]
    %v614 = vld [vmem:[#allocation3 + $0x58] sm:$0xf]
    %v615 = vld [vmem:[#allocation3 + $0x5c] sm:$0xf]
    %v616 = vld [vmem:[#allocation3 + $0x60] sm:$0xf]
    %v617 = vld [vmem:[#allocation3 + $0x64] sm:$0xf]
    %v618 = vld [vmem:[#allocation3 + $0x68] sm:$0xf]
    %v619 = vld [vmem:[#allocation3 + $0x6c] sm:$0xf]
    %v620 = vld [vmem:[#allocation3 + $0x70] sm:$0xf]
    %v621 = vld [vmem:[#allocation3 + $0x74] sm:$0xf]
    %v622 = vld [vmem:[#allocation3 + $0x78] sm:$0xf]
    %v623 = vld [vmem:[#allocation3 + $0x7c] sm:$0xf]
    %v624 = vld [vmem:[%s2] sm:$0x1]
    %v626 = vlaneseq
    %v627 = vshrl.u32 %v626, 7
    %v628 = vsub.s32 0, %v627
    %v629 = vrot.slane %v624, %v628
    %v663 = vunpack.c.l.b16 %v560
    %v664 = vunpack.c.h.b16 %v560
    %v665 = vunpack.c.l.b16 %v561
    %v666 = vunpack.c.h.b16 %v561
    %v667 = vunpack.c.l.b16 %v562
    %v668 = vunpack.c.h.b16 %v562
    %v669 = vunpack.c.l.b16 %v563
    %v670 = vunpack.c.h.b16 %v563
    %v671 = vunpack.c.l.b16 %v564
    %v672 = vunpack.c.h.b16 %v564
    %v673 = vunpack.c.l.b16 %v565
    %v674 = vunpack.c.h.b16 %v565
    %v675 = vunpack.c.l.b16 %v566
    %v676 = vunpack.c.h.b16 %v566
    %v677 = vunpack.c.l.b16 %v567
    %v678 = vunpack.c.h.b16 %v567
    %v679 = vunpack.c.l.b16 %v568
    %v680 = vunpack.c.h.b16 %v568
    %v681 = vunpack.c.l.b16 %v569
    %v682 = vunpack.c.h.b16 %v569
    %v683 = vunpack.c.l.b16 %v570
    %v684 = vunpack.c.h.b16 %v570
    %v685 = vunpack.c.l.b16 %v571
    %v686 = vunpack.c.h.b16 %v571
    %v687 = vunpack.c.l.b16 %v572
    %v688 = vunpack.c.h.b16 %v572
    %v689 = vunpack.c.l.b16 %v573
    %v690 = vunpack.c.h.b16 %v573
    %v691 = vunpack.c.l.b16 %v574
    %v692 = vunpack.c.h.b16 %v574
    %v693 = vunpack.c.l.b16 %v575
    %v694 = vunpack.c.h.b16 %v575
    %v695 = vunpack.c.l.b16 %v576
    %v696 = vunpack.c.h.b16 %v576
    %v697 = vunpack.c.l.b16 %v577
    %v698 = vunpack.c.h.b16 %v577
    %v699 = vunpack.c.l.b16 %v578
    %v700 = vunpack.c.h.b16 %v578
    %v701 = vunpack.c.l.b16 %v579
    %v702 = vunpack.c.h.b16 %v579
    %v703 = vunpack.c.l.b16 %v580
    %v704 = vunpack.c.h.b16 %v580
    %v705 = vunpack.c.l.b16 %v581
    %v706 = vunpack.c.h.b16 %v581
    %v707 = vunpack.c.l.b16 %v582
    %v708 = vunpack.c.h.b16 %v582
    %v709 = vunpack.c.l.b16 %v583
    %v710 = vunpack.c.h.b16 %v583
    %v711 = vunpack.c.l.b16 %v584
    %v712 = vunpack.c.h.b16 %v584
    %v713 = vunpack.c.l.b16 %v585
    %v714 = vunpack.c.h.b16 %v585
    %v715 = vunpack.c.l.b16 %v586
    %v716 = vunpack.c.h.b16 %v586
    %v717 = vunpack.c.l.b16 %v587
    %v718 = vunpack.c.h.b16 %v587
    %v719 = vunpack.c.l.b16 %v588
    %v720 = vunpack.c.h.b16 %v588
    %v721 = vunpack.c.l.b16 %v589
    %v722 = vunpack.c.h.b16 %v589
    %v723 = vunpack.c.l.b16 %v590
    %v724 = vunpack.c.h.b16 %v590
    %v725 = vunpack.c.l.b16 %v591
    %v726 = vunpack.c.h.b16 %v591
    %v727 = vpack.c.b16 %v665, %v663
    %v728 = vpack.c.b16 %v666, %v664
    %v729 = vpack.c.b16 %v669, %v667
    %v730 = vpack.c.b16 %v670, %v668
    %v731 = vpack.c.b16 %v673, %v671
    %v732 = vpack.c.b16 %v674, %v672
    %v733 = vpack.c.b16 %v677, %v675
    %v734 = vpack.c.b16 %v678, %v676
    %v735 = vpack.c.b16 %v681, %v679
    %v736 = vpack.c.b16 %v682, %v680
    %v737 = vpack.c.b16 %v685, %v683
    %v738 = vpack.c.b16 %v686, %v684
    %v739 = vpack.c.b16 %v689, %v687
    %v740 = vpack.c.b16 %v690, %v688
    %v741 = vpack.c.b16 %v693, %v691
    %v742 = vpack.c.b16 %v694, %v692
    %v743 = vpack.c.b16 %v697, %v695
    %v744 = vpack.c.b16 %v698, %v696
    %v745 = vpack.c.b16 %v701, %v699
    %v746 = vpack.c.b16 %v702, %v700
    %v747 = vpack.c.b16 %v705, %v703
    %v748 = vpack.c.b16 %v706, %v704
    %v749 = vpack.c.b16 %v709, %v707
    %v750 = vpack.c.b16 %v710, %v708
    %v751 = vpack.c.b16 %v713, %v711
    %v752 = vpack.c.b16 %v714, %v712
    %v753 = vpack.c.b16 %v717, %v715
    %v754 = vpack.c.b16 %v718, %v716
    %v755 = vpack.c.b16 %v721, %v719
    %v756 = vpack.c.b16 %v722, %v720
    %v757 = vpack.c.b16 %v725, %v723
    %v758 = vpack.c.b16 %v726, %v724
    %v823 = vunpack.c.l.b16 %v592
    %v824 = vunpack.c.l.b16 %v593
    %v825 = vunpack.c.l.b16 %v594
    %v826 = vunpack.c.l.b16 %v595
    %v827 = vunpack.c.l.b16 %v596
    %v828 = vunpack.c.l.b16 %v597
    %v829 = vunpack.c.l.b16 %v598
    %v830 = vunpack.c.l.b16 %v599
    %v831 = vunpack.c.l.b16 %v600
    %v832 = vunpack.c.l.b16 %v601
    %v833 = vunpack.c.l.b16 %v602
    %v834 = vunpack.c.l.b16 %v603
    %v835 = vunpack.c.l.b16 %v604
    %v836 = vunpack.c.l.b16 %v605
    %v837 = vunpack.c.l.b16 %v606
    %v838 = vunpack.c.l.b16 %v607
    %v839 = vunpack.c.l.b16 %v608
    %v840 = vunpack.c.l.b16 %v609
    %v841 = vunpack.c.l.b16 %v610
    %v842 = vunpack.c.l.b16 %v611
    %v843 = vunpack.c.l.b16 %v612
    %v844 = vunpack.c.l.b16 %v613
    %v845 = vunpack.c.l.b16 %v614
    %v846 = vunpack.c.l.b16 %v615
    %v847 = vunpack.c.l.b16 %v616
    %v848 = vunpack.c.l.b16 %v617
    %v849 = vunpack.c.l.b16 %v618
    %v850 = vunpack.c.l.b16 %v619
    %v851 = vunpack.c.l.b16 %v620
    %v852 = vunpack.c.l.b16 %v621
    %v853 = vunpack.c.l.b16 %v622
    %v854 = vunpack.c.l.b16 %v623
    %v855 = vpack.c.b16 %v824, %v823
    %v856 = vpack.c.b16 %v826, %v825
    %v857 = vpack.c.b16 %v828, %v827
    %v858 = vpack.c.b16 %v830, %v829
    %v859 = vpack.c.b16 %v832, %v831
    %v860 = vpack.c.b16 %v834, %v833
    %v861 = vpack.c.b16 %v836, %v835
    %v862 = vpack.c.b16 %v838, %v837
    %v863 = vpack.c.b16 %v840, %v839
    %v864 = vpack.c.b16 %v842, %v841
    %v865 = vpack.c.b16 %v844, %v843
    %v866 = vpack.c.b16 %v846, %v845
    %v867 = vpack.c.b16 %v848, %v847
    %v868 = vpack.c.b16 %v850, %v849
    %v869 = vpack.c.b16 %v852, %v851
    %v870 = vpack.c.b16 %v854, %v853
    %887 = vmatprep.subr.bf16.mxu0 0
    %888 = vmatpush1.bf16.msra.mxu0 %v862
    %889 = vmatprep.subr.bf16.mxu0 0
    %890 = vmatpush1.bf16.msra.mxu0 %v861
    %891 = vmatprep.subr.bf16.mxu0 0
    %892 = vmatpush1.bf16.msra.mxu0 %v860
    %893 = vmatprep.subr.bf16.mxu0 0
    %894 = vmatpush1.bf16.msra.mxu0 %v859
    %895 = vmatprep.subr.bf16.mxu0 0
    %896 = vmatpush1.bf16.msra.mxu0 %v858
    %897 = vmatprep.subr.bf16.mxu0 0
    %898 = vmatpush1.bf16.msra.mxu0 %v857
    %899 = vmatprep.subr.bf16.mxu0 0
    %900 = vmatpush1.bf16.msra.mxu0 %v856
    %901 = vmatprep.subr.bf16.mxu0 0
    %902 = vmatpush1.bf16.msra.mxu0 %v855
    %903 = vmatprep.subr.bf16.mxu0 0
    %904 = vmatpush2.bf16.msra.mxu0 %v870
    %905 = vmatprep.subr.bf16.mxu0 0
    %906 = vmatpush2.bf16.msra.mxu0 %v869
    %907 = vmatprep.subr.bf16.mxu0 0
    %908 = vmatpush2.bf16.msra.mxu0 %v868
    %909 = vmatprep.subr.bf16.mxu0 0
    %910 = vmatpush2.bf16.msra.mxu0 %v867
    %911 = vmatprep.subr.bf16.mxu0 0
    %912 = vmatpush2.bf16.msra.mxu0 %v866
    %913 = vmatprep.subr.bf16.mxu0 0
    %914 = vmatpush2.bf16.msra.mxu0 %v865
    %915 = vmatprep.subr.bf16.mxu0 0
    %916 = vmatpush2.bf16.msra.mxu0 %v864
    %917 = vmatprep.subr.bf16.mxu0 0
    %918 = vmatpush2.bf16.msra.mxu0 %v863
    %919 = vmatprep.mubr.bf16.mxu0 %v728
    %920 = vmatmul.mubr.bf16.gmra.mxu0 %v727
    %v921 = vpop.f32.mrf.mxu0
    %v922 = vadd.f32 %v629, %v921
    %v923 = vpop.f32.mrf.mxu0
    %v924 = vpop.f32.mrf.mxu0
    %v925 = vadd.f32 %v629, %v924
    %v926 = vpop.f32.mrf.mxu0
    %927 = vmatprep.mubr.bf16.mxu0 %v730
    %928 = vmatmul.mubr.bf16.gmra.mxu0 %v729
    %v929 = vpop.f32.mrf.mxu0
    %v930 = vadd.f32 %v629, %v929
    %v931 = vpop.f32.mrf.mxu0
    %v932 = vpop.f32.mrf.mxu0
    %v933 = vadd.f32 %v629, %v932
    %v934 = vpop.f32.mrf.mxu0
    %935 = vmatprep.mubr.bf16.mxu0 %v732
    %936 = vmatmul.mubr.bf16.gmra.mxu0 %v731
    %v937 = vpop.f32.mrf.mxu0
    %v938 = vadd.f32 %v629, %v937
    %v939 = vpop.f32.mrf.mxu0
    %v940 = vpop.f32.mrf.mxu0
    %v941 = vadd.f32 %v629, %v940
    %v942 = vpop.f32.mrf.mxu0
    %943 = vmatprep.mubr.bf16.mxu0 %v734
    %944 = vmatmul.mubr.bf16.gmra.mxu0 %v733
    %v945 = vpop.f32.mrf.mxu0
    %v946 = vadd.f32 %v629, %v945
    %v947 = vpop.f32.mrf.mxu0
    %v948 = vpop.f32.mrf.mxu0
    %v949 = vadd.f32 %v629, %v948
    %v950 = vpop.f32.mrf.mxu0
    %951 = vmatprep.mubr.bf16.mxu0 %v736
    %952 = vmatmul.mubr.bf16.gmra.mxu0 %v735
    %v953 = vpop.f32.mrf.mxu0
    %v954 = vadd.f32 %v629, %v953
    %v955 = vpop.f32.mrf.mxu0
    %v956 = vpop.f32.mrf.mxu0
    %v957 = vadd.f32 %v629, %v956
    %v958 = vpop.f32.mrf.mxu0
    %959 = vmatprep.mubr.bf16.mxu0 %v738
    %960 = vmatmul.mubr.bf16.gmra.mxu0 %v737
    %v961 = vpop.f32.mrf.mxu0
    %v962 = vadd.f32 %v629, %v961
    %v963 = vpop.f32.mrf.mxu0
    %v964 = vpop.f32.mrf.mxu0
    %v965 = vadd.f32 %v629, %v964
    %v966 = vpop.f32.mrf.mxu0
    %967 = vmatprep.mubr.bf16.mxu0 %v740
    %968 = vmatmul.mubr.bf16.gmra.mxu0 %v739
    %v969 = vpop.f32.mrf.mxu0
    %v970 = vadd.f32 %v629, %v969
    %v971 = vpop.f32.mrf.mxu0
    %v972 = vpop.f32.mrf.mxu0
    %v973 = vadd.f32 %v629, %v972
    %v974 = vpop.f32.mrf.mxu0
    %975 = vmatprep.mubr.bf16.mxu0 %v742
    %976 = vmatmul.mubr.bf16.gmra.mxu0 %v741
    %v977 = vpop.f32.mrf.mxu0
    %v978 = vadd.f32 %v629, %v977
    %v979 = vpop.f32.mrf.mxu0
    %v980 = vpop.f32.mrf.mxu0
    %v981 = vadd.f32 %v629, %v980
    %v982 = vpop.f32.mrf.mxu0
    %983 = vmatprep.mubr.bf16.mxu0 %v744
    %984 = vmatmul.mubr.bf16.gmra.mxu0 %v743
    %v985 = vpop.f32.mrf.mxu0
    %v986 = vadd.f32 %v629, %v985
    %v987 = vpop.f32.mrf.mxu0
    %v988 = vpop.f32.mrf.mxu0
    %v989 = vadd.f32 %v629, %v988
    %v990 = vpop.f32.mrf.mxu0
    %991 = vmatprep.mubr.bf16.mxu0 %v746
    %992 = vmatmul.mubr.bf16.gmra.mxu0 %v745
    %v993 = vpop.f32.mrf.mxu0
    %v994 = vadd.f32 %v629, %v993
    %v995 = vpop.f32.mrf.mxu0
    %v996 = vpop.f32.mrf.mxu0
    %v997 = vadd.f32 %v629, %v996
    %v998 = vpop.f32.mrf.mxu0
    %999 = vmatprep.mubr.bf16.mxu0 %v748
    %1000 = vmatmul.mubr.bf16.gmra.mxu0 %v747
    %v1001 = vpop.f32.mrf.mxu0
    %v1002 = vadd.f32 %v629, %v1001
    %v1003 = vpop.f32.mrf.mxu0
    %v1004 = vpop.f32.mrf.mxu0
    %v1005 = vadd.f32 %v629, %v1004
    %v1006 = vpop.f32.mrf.mxu0
    %1007 = vmatprep.mubr.bf16.mxu0 %v750
    %1008 = vmatmul.mubr.bf16.gmra.mxu0 %v749
    %v1009 = vpop.f32.mrf.mxu0
    %v1010 = vadd.f32 %v629, %v1009
    %v1011 = vpop.f32.mrf.mxu0
    %v1012 = vpop.f32.mrf.mxu0
    %v1013 = vadd.f32 %v629, %v1012
    %v1014 = vpop.f32.mrf.mxu0
    %1015 = vmatprep.mubr.bf16.mxu0 %v752
    %1016 = vmatmul.mubr.bf16.gmra.mxu0 %v751
    %v1017 = vpop.f32.mrf.mxu0
    %v1018 = vadd.f32 %v629, %v1017
    %v1019 = vpop.f32.mrf.mxu0
    %v1020 = vpop.f32.mrf.mxu0
    %v1021 = vadd.f32 %v629, %v1020
    %v1022 = vpop.f32.mrf.mxu0
    %1023 = vmatprep.mubr.bf16.mxu0 %v754
    %1024 = vmatmul.mubr.bf16.gmra.mxu0 %v753
    %v1025 = vpop.f32.mrf.mxu0
    %v1026 = vadd.f32 %v629, %v1025
    %v1027 = vpop.f32.mrf.mxu0
    %v1028 = vpop.f32.mrf.mxu0
    %v1029 = vadd.f32 %v629, %v1028
    %v1030 = vpop.f32.mrf.mxu0
    %1031 = vmatprep.mubr.bf16.mxu0 %v756
    %1032 = vmatmul.mubr.bf16.gmra.mxu0 %v755
    %v1033 = vpop.f32.mrf.mxu0
    %v1034 = vadd.f32 %v629, %v1033
    %v1035 = vpop.f32.mrf.mxu0
    %v1036 = vpop.f32.mrf.mxu0
    %v1037 = vadd.f32 %v629, %v1036
    %v1038 = vpop.f32.mrf.mxu0
    %1039 = vmatprep.mubr.bf16.mxu0 %v758
    %1040 = vmatmul.mubr.bf16.gmra.mxu0 %v757
    %v1041 = vpop.f32.mrf.mxu0
    %v1042 = vadd.f32 %v629, %v1041
    %v1043 = vpop.f32.mrf.mxu0
    %v1044 = vpop.f32.mrf.mxu0
    %v1045 = vadd.f32 %v629, %v1044
    %v1046 = vpop.f32.mrf.mxu0
    %1047 = vdwg.mxu0
    %v1048 = vmax.f32 %v922, 0.0
    %v1049 = vmax.f32 %v925, 0.0
    %v1050 = vmax.f32 %v930, 0.0
    %v1051 = vmax.f32 %v933, 0.0
    %v1052 = vmax.f32 %v938, 0.0
    %v1053 = vmax.f32 %v941, 0.0
    %v1054 = vmax.f32 %v946, 0.0
    %v1055 = vmax.f32 %v949, 0.0
    %v1056 = vmax.f32 %v954, 0.0
    %v1057 = vmax.f32 %v957, 0.0
    %v1058 = vmax.f32 %v962, 0.0
    %v1059 = vmax.f32 %v965, 0.0
    %v1060 = vmax.f32 %v970, 0.0
    %v1061 = vmax.f32 %v973, 0.0
    %v1062 = vmax.f32 %v978, 0.0
    %v1063 = vmax.f32 %v981, 0.0
    %v1064 = vmax.f32 %v986, 0.0
    %v1065 = vmax.f32 %v989, 0.0
    %v1066 = vmax.f32 %v994, 0.0
    %v1067 = vmax.f32 %v997, 0.0
    %v1068 = vmax.f32 %v1002, 0.0
    %v1069 = vmax.f32 %v1005, 0.0
    %v1070 = vmax.f32 %v1010, 0.0
    %v1071 = vmax.f32 %v1013, 0.0
    %v1072 = vmax.f32 %v1018, 0.0
    %v1073 = vmax.f32 %v1021, 0.0
    %v1074 = vmax.f32 %v1026, 0.0
    %v1075 = vmax.f32 %v1029, 0.0
    %v1076 = vmax.f32 %v1034, 0.0
    %v1077 = vmax.f32 %v1037, 0.0
    %v1078 = vmax.f32 %v1042, 0.0
    %v1079 = vmax.f32 %v1045, 0.0
    %v1080 = vpack.c.bf16 %v1049, %v1048
    %v1081 = vpack.c.bf16 %v1051, %v1050
    %v1082 = vpack.c.bf16 %v1053, %v1052
    %v1083 = vpack.c.bf16 %v1055, %v1054
    %v1084 = vpack.c.bf16 %v1057, %v1056
    %v1085 = vpack.c.bf16 %v1059, %v1058
    %v1086 = vpack.c.bf16 %v1061, %v1060
    %v1087 = vpack.c.bf16 %v1063, %v1062
    %v1088 = vpack.c.bf16 %v1065, %v1064
    %v1089 = vpack.c.bf16 %v1067, %v1066
    %v1090 = vpack.c.bf16 %v1069, %v1068
    %v1091 = vpack.c.bf16 %v1071, %v1070
    %v1092 = vpack.c.bf16 %v1073, %v1072
    %v1093 = vpack.c.bf16 %v1075, %v1074
    %v1094 = vpack.c.bf16 %v1077, %v1076
    %v1095 = vpack.c.bf16 %v1079, %v1078
    %v1096 = vld [vmem:[#allocation6] sm:$0xf]
    %v1097 = vld [vmem:[#allocation6 + $0x4] sm:$0xf]
    %v1098 = vld [vmem:[#allocation6 + $0x8] sm:$0xf]
    %v1099 = vld [vmem:[#allocation6 + $0xc] sm:$0xf]
    %v1100 = vld [vmem:[#allocation6 + $0x10] sm:$0xf]
    %v1101 = vld [vmem:[#allocation6 + $0x14] sm:$0xf]
    %v1102 = vld [vmem:[#allocation6 + $0x18] sm:$0xf]
    %v1103 = vld [vmem:[#allocation6 + $0x1c] sm:$0xf]
    %v1104 = vld [vmem:[#allocation6 + $0x20] sm:$0xf]
    %v1105 = vld [vmem:[#allocation6 + $0x24] sm:$0xf]
    %v1106 = vld [vmem:[#allocation6 + $0x28] sm:$0xf]
    %v1107 = vld [vmem:[#allocation6 + $0x2c] sm:$0xf]
    %v1108 = vld [vmem:[#allocation6 + $0x30] sm:$0xf]
    %v1109 = vld [vmem:[#allocation6 + $0x34] sm:$0xf]
    %v1110 = vld [vmem:[#allocation6 + $0x38] sm:$0xf]
    %v1111 = vld [vmem:[#allocation6 + $0x3c] sm:$0xf]
    %v1128 = vunpack.c.l.b16 %v1096
    %v1129 = vunpack.c.l.b16 %v1097
    %v1130 = vunpack.c.l.b16 %v1098
    %v1131 = vunpack.c.l.b16 %v1099
    %v1132 = vunpack.c.l.b16 %v1100
    %v1133 = vunpack.c.l.b16 %v1101
    %v1134 = vunpack.c.l.b16 %v1102
    %v1135 = vunpack.c.l.b16 %v1103
    %v1136 = vunpack.c.l.b16 %v1104
    %v1137 = vunpack.c.l.b16 %v1105
    %v1138 = vunpack.c.l.b16 %v1106
    %v1139 = vunpack.c.l.b16 %v1107
    %v1140 = vunpack.c.l.b16 %v1108
    %v1141 = vunpack.c.l.b16 %v1109
    %v1142 = vunpack.c.l.b16 %v1110
    %v1143 = vunpack.c.l.b16 %v1111
    %v1144 = vpack.c.b16 %v1129, %v1128
    %v1145 = vpack.c.b16 %v1131, %v1130
    %v1146 = vpack.c.b16 %v1133, %v1132
    %v1147 = vpack.c.b16 %v1135, %v1134
    %v1148 = vpack.c.b16 %v1137, %v1136
    %v1149 = vpack.c.b16 %v1139, %v1138
    %v1150 = vpack.c.b16 %v1141, %v1140
    %v1151 = vpack.c.b16 %v1143, %v1142
    %1160 = vmatprep.subr.bf16.mxu0 0
    %1161 = vmatpush1.bf16.msra.mxu0 %v1151
    %1162 = vmatprep.subr.bf16.mxu0 0
    %1163 = vmatpush1.bf16.msra.mxu0 %v1150
    %1164 = vmatprep.subr.bf16.mxu0 0
    %1165 = vmatpush1.bf16.msra.mxu0 %v1149
    %1166 = vmatprep.subr.bf16.mxu0 0
    %1167 = vmatpush1.bf16.msra.mxu0 %v1148
    %1168 = vmatprep.subr.bf16.mxu0 0
    %1169 = vmatpush1.bf16.msra.mxu0 %v1147
    %1170 = vmatprep.subr.bf16.mxu0 0
    %1171 = vmatpush1.bf16.msra.mxu0 %v1146
    %1172 = vmatprep.subr.bf16.mxu0 0
    %1173 = vmatpush1.bf16.msra.mxu0 %v1145
    %1174 = vmatprep.subr.bf16.mxu0 0
    %1175 = vmatpush1.bf16.msra.mxu0 %v1144
    %1176 = vmatprep.subr.bf16.mxu0 0
    %1177 = vmatpush2.bf16.msra.mxu0 0
    %1178 = vmatprep.subr.bf16.mxu0 0
    %1179 = vmatpush2.bf16.msra.mxu0 0
    %1180 = vmatprep.subr.bf16.mxu0 0
    %1181 = vmatpush2.bf16.msra.mxu0 0
    %1182 = vmatprep.subr.bf16.mxu0 0
    %1183 = vmatpush2.bf16.msra.mxu0 0
    %1184 = vmatprep.subr.bf16.mxu0 0
    %1185 = vmatpush2.bf16.msra.mxu0 0
    %1186 = vmatprep.subr.bf16.mxu0 0
    %1187 = vmatpush2.bf16.msra.mxu0 0
    %1188 = vmatprep.subr.bf16.mxu0 0
    %1189 = vmatpush2.bf16.msra.mxu0 0
    %1190 = vmatprep.subr.bf16.mxu0 0
    %1191 = vmatpush2.bf16.msra.mxu0 0
    %1192 = vmatprep.mubr.bf16.mxu0 0
    %1193 = vmatmul.mubr.bf16.gmra.mxu0 %v1080
    %v1194 = vpop.f32.mrf.mxu0
    %v1195 = vadd.f32 0.0, %v1194
    %v1196 = vpop.f32.mrf.mxu0
    %v1197 = vpop.f32.mrf.mxu0
    %v1198 = vadd.f32 0.0, %v1197
    %v1199 = vpop.f32.mrf.mxu0
    %1200 = vmatprep.mubr.bf16.mxu0 0
    %1201 = vmatmul.mubr.bf16.gmra.mxu0 %v1081
    %v1202 = vpop.f32.mrf.mxu0
    %v1203 = vadd.f32 0.0, %v1202
    %v1204 = vpop.f32.mrf.mxu0
    %v1205 = vpop.f32.mrf.mxu0
    %v1206 = vadd.f32 0.0, %v1205
    %v1207 = vpop.f32.mrf.mxu0
    %1208 = vmatprep.mubr.bf16.mxu0 0
    %1209 = vmatmul.mubr.bf16.gmra.mxu0 %v1082
    %v1210 = vpop.f32.mrf.mxu0
    %v1211 = vadd.f32 0.0, %v1210
    %v1212 = vpop.f32.mrf.mxu0
    %v1213 = vpop.f32.mrf.mxu0
    %v1214 = vadd.f32 0.0, %v1213
    %v1215 = vpop.f32.mrf.mxu0
    %1216 = vmatprep.mubr.bf16.mxu0 0
    %1217 = vmatmul.mubr.bf16.gmra.mxu0 %v1083
    %v1218 = vpop.f32.mrf.mxu0
    %v1219 = vadd.f32 0.0, %v1218
    %v1220 = vpop.f32.mrf.mxu0
    %v1221 = vpop.f32.mrf.mxu0
    %v1222 = vadd.f32 0.0, %v1221
    %v1223 = vpop.f32.mrf.mxu0
    %1224 = vmatprep.mubr.bf16.mxu0 0
    %1225 = vmatmul.mubr.bf16.gmra.mxu0 %v1084
    %v1226 = vpop.f32.mrf.mxu0
    %v1227 = vadd.f32 0.0, %v1226
    %v1228 = vpop.f32.mrf.mxu0
    %v1229 = vpop.f32.mrf.mxu0
    %v1230 = vadd.f32 0.0, %v1229
    %v1231 = vpop.f32.mrf.mxu0
    %1232 = vmatprep.mubr.bf16.mxu0 0
    %1233 = vmatmul.mubr.bf16.gmra.mxu0 %v1085
    %v1234 = vpop.f32.mrf.mxu0
    %v1235 = vadd.f32 0.0, %v1234
    %v1236 = vpop.f32.mrf.mxu0
    %v1237 = vpop.f32.mrf.mxu0
    %v1238 = vadd.f32 0.0, %v1237
    %v1239 = vpop.f32.mrf.mxu0
    %1240 = vmatprep.mubr.bf16.mxu0 0
    %1241 = vmatmul.mubr.bf16.gmra.mxu0 %v1086
    %v1242 = vpop.f32.mrf.mxu0
    %v1243 = vadd.f32 0.0, %v1242
    %v1244 = vpop.f32.mrf.mxu0
    %v1245 = vpop.f32.mrf.mxu0
    %v1246 = vadd.f32 0.0, %v1245
    %v1247 = vpop.f32.mrf.mxu0
    %1248 = vmatprep.mubr.bf16.mxu0 0
    %1249 = vmatmul.mubr.bf16.gmra.mxu0 %v1087
    %v1250 = vpop.f32.mrf.mxu0
    %v1251 = vadd.f32 0.0, %v1250
    %v1252 = vpop.f32.mrf.mxu0
    %v1253 = vpop.f32.mrf.mxu0
    %v1254 = vadd.f32 0.0, %v1253
    %v1255 = vpop.f32.mrf.mxu0
    %1256 = vmatprep.mubr.bf16.mxu0 0
    %1257 = vmatmul.mubr.bf16.gmra.mxu0 %v1088
    %v1258 = vpop.f32.mrf.mxu0
    %v1259 = vadd.f32 0.0, %v1258
    %v1260 = vpop.f32.mrf.mxu0
    %v1261 = vpop.f32.mrf.mxu0
    %v1262 = vadd.f32 0.0, %v1261
    %v1263 = vpop.f32.mrf.mxu0
    %1264 = vmatprep.mubr.bf16.mxu0 0
    %1265 = vmatmul.mubr.bf16.gmra.mxu0 %v1089
    %v1266 = vpop.f32.mrf.mxu0
    %v1267 = vadd.f32 0.0, %v1266
    %v1268 = vpop.f32.mrf.mxu0
    %v1269 = vpop.f32.mrf.mxu0
    %v1270 = vadd.f32 0.0, %v1269
    %v1271 = vpop.f32.mrf.mxu0
    %1272 = vmatprep.mubr.bf16.mxu0 0
    %1273 = vmatmul.mubr.bf16.gmra.mxu0 %v1090
    %v1274 = vpop.f32.mrf.mxu0
    %v1275 = vadd.f32 0.0, %v1274
    %v1276 = vpop.f32.mrf.mxu0
    %v1277 = vpop.f32.mrf.mxu0
    %v1278 = vadd.f32 0.0, %v1277
    %v1279 = vpop.f32.mrf.mxu0
    %1280 = vmatprep.mubr.bf16.mxu0 0
    %1281 = vmatmul.mubr.bf16.gmra.mxu0 %v1091
    %v1282 = vpop.f32.mrf.mxu0
    %v1283 = vadd.f32 0.0, %v1282
    %v1284 = vpop.f32.mrf.mxu0
    %v1285 = vpop.f32.mrf.mxu0
    %v1286 = vadd.f32 0.0, %v1285
    %v1287 = vpop.f32.mrf.mxu0
    %1288 = vmatprep.mubr.bf16.mxu0 0
    %1289 = vmatmul.mubr.bf16.gmra.mxu0 %v1092
    %v1290 = vpop.f32.mrf.mxu0
    %v1291 = vadd.f32 0.0, %v1290
    %v1292 = vpop.f32.mrf.mxu0
    %v1293 = vpop.f32.mrf.mxu0
    %v1294 = vadd.f32 0.0, %v1293
    %v1295 = vpop.f32.mrf.mxu0
    %1296 = vmatprep.mubr.bf16.mxu0 0
    %1297 = vmatmul.mubr.bf16.gmra.mxu0 %v1093
    %v1298 = vpop.f32.mrf.mxu0
    %v1299 = vadd.f32 0.0, %v1298
    %v1300 = vpop.f32.mrf.mxu0
    %v1301 = vpop.f32.mrf.mxu0
    %v1302 = vadd.f32 0.0, %v1301
    %v1303 = vpop.f32.mrf.mxu0
    %1304 = vmatprep.mubr.bf16.mxu0 0
    %1305 = vmatmul.mubr.bf16.gmra.mxu0 %v1094
    %v1306 = vpop.f32.mrf.mxu0
    %v1307 = vadd.f32 0.0, %v1306
    %v1308 = vpop.f32.mrf.mxu0
    %v1309 = vpop.f32.mrf.mxu0
    %v1310 = vadd.f32 0.0, %v1309
    %v1311 = vpop.f32.mrf.mxu0
    %1312 = vmatprep.mubr.bf16.mxu0 0
    %1313 = vmatmul.mubr.bf16.gmra.mxu0 %v1095
    %v1314 = vpop.f32.mrf.mxu0
    %v1315 = vadd.f32 0.0, %v1314
    %v1316 = vpop.f32.mrf.mxu0
    %v1317 = vpop.f32.mrf.mxu0
    %v1318 = vadd.f32 0.0, %v1317
    %v1319 = vpop.f32.mrf.mxu0
    %1320 = vdwg.mxu0
    %v1321 = vpack.c.bf16 %v1198, %v1195
    %v1322 = vpack.c.bf16 %v1206, %v1203
    %v1323 = vpack.c.bf16 %v1214, %v1211
    %v1324 = vpack.c.bf16 %v1222, %v1219
    %v1325 = vpack.c.bf16 %v1230, %v1227
    %v1326 = vpack.c.bf16 %v1238, %v1235
    %v1327 = vpack.c.bf16 %v1246, %v1243
    %v1328 = vpack.c.bf16 %v1254, %v1251
    %v1329 = vpack.c.bf16 %v1262, %v1259
    %v1330 = vpack.c.bf16 %v1270, %v1267
    %v1331 = vpack.c.bf16 %v1278, %v1275
    %v1332 = vpack.c.bf16 %v1286, %v1283
    %v1333 = vpack.c.bf16 %v1294, %v1291
    %v1334 = vpack.c.bf16 %v1302, %v1299
    %v1335 = vpack.c.bf16 %v1310, %v1307
    %v1336 = vpack.c.bf16 %v1318, %v1315
    %v1353 = vunpack.c.l.b16 %v1321
    %v1354 = vunpack.c.h.b16 %v1321
    %v1355 = vunpack.c.l.b16 %v1322
    %v1356 = vunpack.c.h.b16 %v1322
    %v1357 = vunpack.c.l.b16 %v1323
    %v1358 = vunpack.c.h.b16 %v1323
    %v1359 = vunpack.c.l.b16 %v1324
    %v1360 = vunpack.c.h.b16 %v1324
    %v1361 = vunpack.c.l.b16 %v1325
    %v1362 = vunpack.c.h.b16 %v1325
    %v1363 = vunpack.c.l.b16 %v1326
    %v1364 = vunpack.c.h.b16 %v1326
    %v1365 = vunpack.c.l.b16 %v1327
    %v1366 = vunpack.c.h.b16 %v1327
    %v1367 = vunpack.c.l.b16 %v1328
    %v1368 = vunpack.c.h.b16 %v1328
    %v1369 = vunpack.c.l.b16 %v1329
    %v1370 = vunpack.c.h.b16 %v1329
    %v1371 = vunpack.c.l.b16 %v1330
    %v1372 = vunpack.c.h.b16 %v1330
    %v1373 = vunpack.c.l.b16 %v1331
    %v1374 = vunpack.c.h.b16 %v1331
    %v1375 = vunpack.c.l.b16 %v1332
    %v1376 = vunpack.c.h.b16 %v1332
    %v1377 = vunpack.c.l.b16 %v1333
    %v1378 = vunpack.c.h.b16 %v1333
    %v1379 = vunpack.c.l.b16 %v1334
    %v1380 = vunpack.c.h.b16 %v1334
    %v1381 = vunpack.c.l.b16 %v1335
    %v1382 = vunpack.c.h.b16 %v1335
    %v1383 = vunpack.c.l.b16 %v1336
    %v1384 = vunpack.c.h.b16 %v1336
    %v1385 = vpack.c.b16 %v1353, %v1353
    %v1386 = vpack.c.b16 %v1354, %v1354
    %v1387 = vpack.c.b16 %v1355, %v1355
    %v1388 = vpack.c.b16 %v1356, %v1356
    %v1389 = vpack.c.b16 %v1357, %v1357
    %v1390 = vpack.c.b16 %v1358, %v1358
    %v1391 = vpack.c.b16 %v1359, %v1359
    %v1392 = vpack.c.b16 %v1360, %v1360
    %v1393 = vpack.c.b16 %v1361, %v1361
    %v1394 = vpack.c.b16 %v1362, %v1362
    %v1395 = vpack.c.b16 %v1363, %v1363
    %v1396 = vpack.c.b16 %v1364, %v1364
    %v1397 = vpack.c.b16 %v1365, %v1365
    %v1398 = vpack.c.b16 %v1366, %v1366
    %v1399 = vpack.c.b16 %v1367, %v1367
    %v1400 = vpack.c.b16 %v1368, %v1368
    %v1401 = vpack.c.b16 %v1369, %v1369
    %v1402 = vpack.c.b16 %v1370, %v1370
    %v1403 = vpack.c.b16 %v1371, %v1371
    %v1404 = vpack.c.b16 %v1372, %v1372
    %v1405 = vpack.c.b16 %v1373, %v1373
    %v1406 = vpack.c.b16 %v1374, %v1374
    %v1407 = vpack.c.b16 %v1375, %v1375
    %v1408 = vpack.c.b16 %v1376, %v1376
    %v1409 = vpack.c.b16 %v1377, %v1377
    %v1410 = vpack.c.b16 %v1378, %v1378
    %v1411 = vpack.c.b16 %v1379, %v1379
    %v1412 = vpack.c.b16 %v1380, %v1380
    %v1413 = vpack.c.b16 %v1381, %v1381
    %v1414 = vpack.c.b16 %v1382, %v1382
    %v1415 = vpack.c.b16 %v1383, %v1383
    %v1416 = vpack.c.b16 %v1384, %v1384
    %1449 = vst [vmem:[#allocation4] sm:$0xf] %v1385
    %1450 = vst [vmem:[#allocation4 + $0x4] sm:$0xf] %v1386
    %1451 = vst [vmem:[#allocation4 + $0x8] sm:$0xf] %v1387
    %1452 = vst [vmem:[#allocation4 + $0xc] sm:$0xf] %v1388
    %1453 = vst [vmem:[#allocation4 + $0x10] sm:$0xf] %v1389
    %1454 = vst [vmem:[#allocation4 + $0x14] sm:$0xf] %v1390
    %1455 = vst [vmem:[#allocation4 + $0x18] sm:$0xf] %v1391
    %1456 = vst [vmem:[#allocation4 + $0x1c] sm:$0xf] %v1392
    %1457 = vst [vmem:[#allocation4 + $0x20] sm:$0xf] %v1393
    %1458 = vst [vmem:[#allocation4 + $0x24] sm:$0xf] %v1394
    %1459 = vst [vmem:[#allocation4 + $0x28] sm:$0xf] %v1395
    %1460 = vst [vmem:[#allocation4 + $0x2c] sm:$0xf] %v1396
    %1461 = vst [vmem:[#allocation4 + $0x30] sm:$0xf] %v1397
    %1462 = vst [vmem:[#allocation4 + $0x34] sm:$0xf] %v1398
    %1463 = vst [vmem:[#allocation4 + $0x38] sm:$0xf] %v1399
    %1464 = vst [vmem:[#allocation4 + $0x3c] sm:$0xf] %v1400
    %1465 = vst [vmem:[#allocation4 + $0x40] sm:$0xf] %v1401
    %1466 = vst [vmem:[#allocation4 + $0x44] sm:$0xf] %v1402
    %1467 = vst [vmem:[#allocation4 + $0x48] sm:$0xf] %v1403
    %1468 = vst [vmem:[#allocation4 + $0x4c] sm:$0xf] %v1404
    %1469 = vst [vmem:[#allocation4 + $0x50] sm:$0xf] %v1405
    %1470 = vst [vmem:[#allocation4 + $0x54] sm:$0xf] %v1406
    %1471 = vst [vmem:[#allocation4 + $0x58] sm:$0xf] %v1407
    %1472 = vst [vmem:[#allocation4 + $0x5c] sm:$0xf] %v1408
    %1473 = vst [vmem:[#allocation4 + $0x60] sm:$0xf] %v1409
    %1474 = vst [vmem:[#allocation4 + $0x64] sm:$0xf] %v1410
    %1475 = vst [vmem:[#allocation4 + $0x68] sm:$0xf] %v1411
    %1476 = vst [vmem:[#allocation4 + $0x6c] sm:$0xf] %v1412
    %1477 = vst [vmem:[#allocation4 + $0x70] sm:$0xf] %v1413
    %1478 = vst [vmem:[#allocation4 + $0x74] sm:$0xf] %v1414
    %1479 = vst [vmem:[#allocation4 + $0x78] sm:$0xf] %v1415
    %1480 = vst [vmem:[#allocation4 + $0x7c] sm:$0xf] %v1416
    %v1481 = vld [vmem:[#allocation2] sm:$0xff]
    %v1482 = vld [vmem:[#allocation2 + $0x8] sm:$0xff]
    %v1483 = vld [vmem:[#allocation2 + $0x10] sm:$0xff]
    %v1484 = vld [vmem:[#allocation2 + $0x18] sm:$0xff]
    %v1485 = vld [vmem:[#allocation2 + $0x20] sm:$0xff]
    %v1486 = vld [vmem:[#allocation2 + $0x28] sm:$0xff]
    %v1487 = vld [vmem:[#allocation2 + $0x30] sm:$0xff]
    %v1488 = vld [vmem:[#allocation2 + $0x38] sm:$0xff]
    %v1489 = vld [vmem:[#allocation2 + $0x40] sm:$0xff]
    %v1490 = vld [vmem:[#allocation2 + $0x48] sm:$0xff]
    %v1491 = vld [vmem:[#allocation2 + $0x50] sm:$0xff]
    %v1492 = vld [vmem:[#allocation2 + $0x58] sm:$0xff]
    %v1493 = vld [vmem:[#allocation2 + $0x60] sm:$0xff]
    %v1494 = vld [vmem:[#allocation2 + $0x68] sm:$0xff]
    %v1495 = vld [vmem:[#allocation2 + $0x70] sm:$0xff]
    %v1496 = vld [vmem:[#allocation2 + $0x78] sm:$0xff]
    %v1497 = vld [vmem:[#allocation2 + $0x80] sm:$0xff]
    %v1498 = vld [vmem:[#allocation2 + $0x88] sm:$0xff]
    %v1499 = vld [vmem:[#allocation2 + $0x90] sm:$0xff]
    %v1500 = vld [vmem:[#allocation2 + $0x98] sm:$0xff]
    %v1501 = vld [vmem:[#allocation2 + $0xa0] sm:$0xff]
    %v1502 = vld [vmem:[#allocation2 + $0xa8] sm:$0xff]
    %v1503 = vld [vmem:[#allocation2 + $0xb0] sm:$0xff]
    %v1504 = vld [vmem:[#allocation2 + $0xb8] sm:$0xff]
    %v1505 = vld [vmem:[#allocation2 + $0xc0] sm:$0xff]
    %v1506 = vld [vmem:[#allocation2 + $0xc8] sm:$0xff]
    %v1507 = vld [vmem:[#allocation2 + $0xd0] sm:$0xff]
    %v1508 = vld [vmem:[#allocation2 + $0xd8] sm:$0xff]
    %v1509 = vld [vmem:[#allocation2 + $0xe0] sm:$0xff]
    %v1510 = vld [vmem:[#allocation2 + $0xe8] sm:$0xff]
    %v1511 = vld [vmem:[#allocation2 + $0xf0] sm:$0xff]
    %v1512 = vld [vmem:[#allocation2 + $0xf8] sm:$0xff]
    %v1513 = vld [vmem:[#allocation4] sm:$0xf]
    %v1514 = vld [vmem:[#allocation4 + $0x4] sm:$0xf]
    %v1515 = vld [vmem:[#allocation4 + $0x8] sm:$0xf]
    %v1516 = vld [vmem:[#allocation4 + $0xc] sm:$0xf]
    %v1517 = vld [vmem:[#allocation4 + $0x10] sm:$0xf]
    %v1518 = vld [vmem:[#allocation4 + $0x14] sm:$0xf]
    %v1519 = vld [vmem:[#allocation4 + $0x18] sm:$0xf]
    %v1520 = vld [vmem:[#allocation4 + $0x1c] sm:$0xf]
    %v1521 = vld [vmem:[#allocation4 + $0x20] sm:$0xf]
    %v1522 = vld [vmem:[#allocation4 + $0x24] sm:$0xf]
    %v1523 = vld [vmem:[#allocation4 + $0x28] sm:$0xf]
    %v1524 = vld [vmem:[#allocation4 + $0x2c] sm:$0xf]
    %v1525 = vld [vmem:[#allocation4 + $0x30] sm:$0xf]
    %v1526 = vld [vmem:[#allocation4 + $0x34] sm:$0xf]
    %v1527 = vld [vmem:[#allocation4 + $0x38] sm:$0xf]
    %v1528 = vld [vmem:[#allocation4 + $0x3c] sm:$0xf]
    %v1529 = vld [vmem:[#allocation4 + $0x40] sm:$0xf]
    %v1530 = vld [vmem:[#allocation4 + $0x44] sm:$0xf]
    %v1531 = vld [vmem:[#allocation4 + $0x48] sm:$0xf]
    %v1532 = vld [vmem:[#allocation4 + $0x4c] sm:$0xf]
    %v1533 = vld [vmem:[#allocation4 + $0x50] sm:$0xf]
    %v1534 = vld [vmem:[#allocation4 + $0x54] sm:$0xf]
    %v1535 = vld [vmem:[#allocation4 + $0x58] sm:$0xf]
    %v1536 = vld [vmem:[#allocation4 + $0x5c] sm:$0xf]
    %v1537 = vld [vmem:[#allocation4 + $0x60] sm:$0xf]
    %v1538 = vld [vmem:[#allocation4 + $0x64] sm:$0xf]
    %v1539 = vld [vmem:[#allocation4 + $0x68] sm:$0xf]
    %v1540 = vld [vmem:[#allocation4 + $0x6c] sm:$0xf]
    %v1541 = vld [vmem:[#allocation4 + $0x70] sm:$0xf]
    %v1542 = vld [vmem:[#allocation4 + $0x74] sm:$0xf]
    %v1543 = vld [vmem:[#allocation4 + $0x78] sm:$0xf]
    %v1544 = vld [vmem:[#allocation4 + $0x7c] sm:$0xf]
    %v1545 = vld [vmem:[%s4] sm:$0x1]
    %v1547 = vlaneseq
    %v1548 = vshrl.u32 %v1547, 7
    %v1549 = vsub.s32 0, %v1548
    %v1550 = vrot.slane %v1545, %v1549
    %v1584 = vunpack.c.l.b16 %v1481
    %v1585 = vunpack.c.h.b16 %v1481
    %v1586 = vunpack.c.l.b16 %v1482
    %v1587 = vunpack.c.h.b16 %v1482
    %v1588 = vunpack.c.l.b16 %v1483
    %v1589 = vunpack.c.h.b16 %v1483
    %v1590 = vunpack.c.l.b16 %v1484
    %v1591 = vunpack.c.h.b16 %v1484
    %v1592 = vunpack.c.l.b16 %v1485
    %v1593 = vunpack.c.h.b16 %v1485
    %v1594 = vunpack.c.l.b16 %v1486
    %v1595 = vunpack.c.h.b16 %v1486
    %v1596 = vunpack.c.l.b16 %v1487
    %v1597 = vunpack.c.h.b16 %v1487
    %v1598 = vunpack.c.l.b16 %v1488
    %v1599 = vunpack.c.h.b16 %v1488
    %v1600 = vunpack.c.l.b16 %v1489
    %v1601 = vunpack.c.h.b16 %v1489
    %v1602 = vunpack.c.l.b16 %v1490
    %v1603 = vunpack.c.h.b16 %v1490
    %v1604 = vunpack.c.l.b16 %v1491
    %v1605 = vunpack.c.h.b16 %v1491
    %v1606 = vunpack.c.l.b16 %v1492
    %v1607 = vunpack.c.h.b16 %v1492
    %v1608 = vunpack.c.l.b16 %v1493
    %v1609 = vunpack.c.h.b16 %v1493
    %v1610 = vunpack.c.l.b16 %v1494
    %v1611 = vunpack.c.h.b16 %v1494
    %v1612 = vunpack.c.l.b16 %v1495
    %v1613 = vunpack.c.h.b16 %v1495
    %v1614 = vunpack.c.l.b16 %v1496
    %v1615 = vunpack.c.h.b16 %v1496
    %v1616 = vunpack.c.l.b16 %v1497
    %v1617 = vunpack.c.h.b16 %v1497
    %v1618 = vunpack.c.l.b16 %v1498
    %v1619 = vunpack.c.h.b16 %v1498
    %v1620 = vunpack.c.l.b16 %v1499
    %v1621 = vunpack.c.h.b16 %v1499
    %v1622 = vunpack.c.l.b16 %v1500
    %v1623 = vunpack.c.h.b16 %v1500
    %v1624 = vunpack.c.l.b16 %v1501
    %v1625 = vunpack.c.h.b16 %v1501
    %v1626 = vunpack.c.l.b16 %v1502
    %v1627 = vunpack.c.h.b16 %v1502
    %v1628 = vunpack.c.l.b16 %v1503
    %v1629 = vunpack.c.h.b16 %v1503
    %v1630 = vunpack.c.l.b16 %v1504
    %v1631 = vunpack.c.h.b16 %v1504
    %v1632 = vunpack.c.l.b16 %v1505
    %v1633 = vunpack.c.h.b16 %v1505
    %v1634 = vunpack.c.l.b16 %v1506
    %v1635 = vunpack.c.h.b16 %v1506
    %v1636 = vunpack.c.l.b16 %v1507
    %v1637 = vunpack.c.h.b16 %v1507
    %v1638 = vunpack.c.l.b16 %v1508
    %v1639 = vunpack.c.h.b16 %v1508
    %v1640 = vunpack.c.l.b16 %v1509
    %v1641 = vunpack.c.h.b16 %v1509
    %v1642 = vunpack.c.l.b16 %v1510
    %v1643 = vunpack.c.h.b16 %v1510
    %v1644 = vunpack.c.l.b16 %v1511
    %v1645 = vunpack.c.h.b16 %v1511
    %v1646 = vunpack.c.l.b16 %v1512
    %v1647 = vunpack.c.h.b16 %v1512
    %v1648 = vpack.c.b16 %v1586, %v1584
    %v1649 = vpack.c.b16 %v1587, %v1585
    %v1650 = vpack.c.b16 %v1590, %v1588
    %v1651 = vpack.c.b16 %v1591, %v1589
    %v1652 = vpack.c.b16 %v1594, %v1592
    %v1653 = vpack.c.b16 %v1595, %v1593
    %v1654 = vpack.c.b16 %v1598, %v1596
    %v1655 = vpack.c.b16 %v1599, %v1597
    %v1656 = vpack.c.b16 %v1602, %v1600
    %v1657 = vpack.c.b16 %v1603, %v1601
    %v1658 = vpack.c.b16 %v1606, %v1604
    %v1659 = vpack.c.b16 %v1607, %v1605
    %v1660 = vpack.c.b16 %v1610, %v1608
    %v1661 = vpack.c.b16 %v1611, %v1609
    %v1662 = vpack.c.b16 %v1614, %v1612
    %v1663 = vpack.c.b16 %v1615, %v1613
    %v1664 = vpack.c.b16 %v1618, %v1616
    %v1665 = vpack.c.b16 %v1619, %v1617
    %v1666 = vpack.c.b16 %v1622, %v1620
    %v1667 = vpack.c.b16 %v1623, %v1621
    %v1668 = vpack.c.b16 %v1626, %v1624
    %v1669 = vpack.c.b16 %v1627, %v1625
    %v1670 = vpack.c.b16 %v1630, %v1628
    %v1671 = vpack.c.b16 %v1631, %v1629
    %v1672 = vpack.c.b16 %v1634, %v1632
    %v1673 = vpack.c.b16 %v1635, %v1633
    %v1674 = vpack.c.b16 %v1638, %v1636
    %v1675 = vpack.c.b16 %v1639, %v1637
    %v1676 = vpack.c.b16 %v1642, %v1640
    %v1677 = vpack.c.b16 %v1643, %v1641
    %v1678 = vpack.c.b16 %v1646, %v1644
    %v1679 = vpack.c.b16 %v1647, %v1645
    %v1744 = vunpack.c.l.b16 %v1513
    %v1745 = vunpack.c.l.b16 %v1514
    %v1746 = vunpack.c.l.b16 %v1515
    %v1747 = vunpack.c.l.b16 %v1516
    %v1748 = vunpack.c.l.b16 %v1517
    %v1749 = vunpack.c.l.b16 %v1518
    %v1750 = vunpack.c.l.b16 %v1519
    %v1751 = vunpack.c.l.b16 %v1520
    %v1752 = vunpack.c.l.b16 %v1521
    %v1753 = vunpack.c.l.b16 %v1522
    %v1754 = vunpack.c.l.b16 %v1523
    %v1755 = vunpack.c.l.b16 %v1524
    %v1756 = vunpack.c.l.b16 %v1525
    %v1757 = vunpack.c.l.b16 %v1526
    %v1758 = vunpack.c.l.b16 %v1527
    %v1759 = vunpack.c.l.b16 %v1528
    %v1760 = vunpack.c.l.b16 %v1529
    %v1761 = vunpack.c.l.b16 %v1530
    %v1762 = vunpack.c.l.b16 %v1531
    %v1763 = vunpack.c.l.b16 %v1532
    %v1764 = vunpack.c.l.b16 %v1533
    %v1765 = vunpack.c.l.b16 %v1534
    %v1766 = vunpack.c.l.b16 %v1535
    %v1767 = vunpack.c.l.b16 %v1536
    %v1768 = vunpack.c.l.b16 %v1537
    %v1769 = vunpack.c.l.b16 %v1538
    %v1770 = vunpack.c.l.b16 %v1539
    %v1771 = vunpack.c.l.b16 %v1540
    %v1772 = vunpack.c.l.b16 %v1541
    %v1773 = vunpack.c.l.b16 %v1542
    %v1774 = vunpack.c.l.b16 %v1543
    %v1775 = vunpack.c.l.b16 %v1544
    %v1776 = vpack.c.b16 %v1745, %v1744
    %v1777 = vpack.c.b16 %v1747, %v1746
    %v1778 = vpack.c.b16 %v1749, %v1748
    %v1779 = vpack.c.b16 %v1751, %v1750
    %v1780 = vpack.c.b16 %v1753, %v1752
    %v1781 = vpack.c.b16 %v1755, %v1754
    %v1782 = vpack.c.b16 %v1757, %v1756
    %v1783 = vpack.c.b16 %v1759, %v1758
    %v1784 = vpack.c.b16 %v1761, %v1760
    %v1785 = vpack.c.b16 %v1763, %v1762
    %v1786 = vpack.c.b16 %v1765, %v1764
    %v1787 = vpack.c.b16 %v1767, %v1766
    %v1788 = vpack.c.b16 %v1769, %v1768
    %v1789 = vpack.c.b16 %v1771, %v1770
    %v1790 = vpack.c.b16 %v1773, %v1772
    %v1791 = vpack.c.b16 %v1775, %v1774
    %1808 = vmatprep.subr.bf16.mxu0 0
    %1809 = vmatpush1.bf16.msra.mxu0 %v1783
    %1810 = vmatprep.subr.bf16.mxu0 0
    %1811 = vmatpush1.bf16.msra.mxu0 %v1782
    %1812 = vmatprep.subr.bf16.mxu0 0
    %1813 = vmatpush1.bf16.msra.mxu0 %v1781
    %1814 = vmatprep.subr.bf16.mxu0 0
    %1815 = vmatpush1.bf16.msra.mxu0 %v1780
    %1816 = vmatprep.subr.bf16.mxu0 0
    %1817 = vmatpush1.bf16.msra.mxu0 %v1779
    %1818 = vmatprep.subr.bf16.mxu0 0
    %1819 = vmatpush1.bf16.msra.mxu0 %v1778
    %1820 = vmatprep.subr.bf16.mxu0 0
    %1821 = vmatpush1.bf16.msra.mxu0 %v1777
    %1822 = vmatprep.subr.bf16.mxu0 0
    %1823 = vmatpush1.bf16.msra.mxu0 %v1776
    %1824 = vmatprep.subr.bf16.mxu0 0
    %1825 = vmatpush2.bf16.msra.mxu0 %v1791
    %1826 = vmatprep.subr.bf16.mxu0 0
    %1827 = vmatpush2.bf16.msra.mxu0 %v1790
    %1828 = vmatprep.subr.bf16.mxu0 0
    %1829 = vmatpush2.bf16.msra.mxu0 %v1789
    %1830 = vmatprep.subr.bf16.mxu0 0
    %1831 = vmatpush2.bf16.msra.mxu0 %v1788
    %1832 = vmatprep.subr.bf16.mxu0 0
    %1833 = vmatpush2.bf16.msra.mxu0 %v1787
    %1834 = vmatprep.subr.bf16.mxu0 0
    %1835 = vmatpush2.bf16.msra.mxu0 %v1786
    %1836 = vmatprep.subr.bf16.mxu0 0
    %1837 = vmatpush2.bf16.msra.mxu0 %v1785
    %1838 = vmatprep.subr.bf16.mxu0 0
    %1839 = vmatpush2.bf16.msra.mxu0 %v1784
    %1840 = vmatprep.mubr.bf16.mxu0 %v1649
    %1841 = vmatmul.mubr.bf16.gmra.mxu0 %v1648
    %v1842 = vpop.f32.mrf.mxu0
    %v1843 = vadd.f32 %v1550, %v1842
    %v1844 = vpop.f32.mrf.mxu0
    %v1845 = vpop.f32.mrf.mxu0
    %v1846 = vadd.f32 %v1550, %v1845
    %v1847 = vpop.f32.mrf.mxu0
    %1848 = vmatprep.mubr.bf16.mxu0 %v1651
    %1849 = vmatmul.mubr.bf16.gmra.mxu0 %v1650
    %v1850 = vpop.f32.mrf.mxu0
    %v1851 = vadd.f32 %v1550, %v1850
    %v1852 = vpop.f32.mrf.mxu0
    %v1853 = vpop.f32.mrf.mxu0
    %v1854 = vadd.f32 %v1550, %v1853
    %v1855 = vpop.f32.mrf.mxu0
    %1856 = vmatprep.mubr.bf16.mxu0 %v1653
    %1857 = vmatmul.mubr.bf16.gmra.mxu0 %v1652
    %v1858 = vpop.f32.mrf.mxu0
    %v1859 = vadd.f32 %v1550, %v1858
    %v1860 = vpop.f32.mrf.mxu0
    %v1861 = vpop.f32.mrf.mxu0
    %v1862 = vadd.f32 %v1550, %v1861
    %v1863 = vpop.f32.mrf.mxu0
    %1864 = vmatprep.mubr.bf16.mxu0 %v1655
    %1865 = vmatmul.mubr.bf16.gmra.mxu0 %v1654
    %v1866 = vpop.f32.mrf.mxu0
    %v1867 = vadd.f32 %v1550, %v1866
    %v1868 = vpop.f32.mrf.mxu0
    %v1869 = vpop.f32.mrf.mxu0
    %v1870 = vadd.f32 %v1550, %v1869
    %v1871 = vpop.f32.mrf.mxu0
    %1872 = vmatprep.mubr.bf16.mxu0 %v1657
    %1873 = vmatmul.mubr.bf16.gmra.mxu0 %v1656
    %v1874 = vpop.f32.mrf.mxu0
    %v1875 = vadd.f32 %v1550, %v1874
    %v1876 = vpop.f32.mrf.mxu0
    %v1877 = vpop.f32.mrf.mxu0
    %v1878 = vadd.f32 %v1550, %v1877
    %v1879 = vpop.f32.mrf.mxu0
    %1880 = vmatprep.mubr.bf16.mxu0 %v1659
    %1881 = vmatmul.mubr.bf16.gmra.mxu0 %v1658
    %v1882 = vpop.f32.mrf.mxu0
    %v1883 = vadd.f32 %v1550, %v1882
    %v1884 = vpop.f32.mrf.mxu0
    %v1885 = vpop.f32.mrf.mxu0
    %v1886 = vadd.f32 %v1550, %v1885
    %v1887 = vpop.f32.mrf.mxu0
    %1888 = vmatprep.mubr.bf16.mxu0 %v1661
    %1889 = vmatmul.mubr.bf16.gmra.mxu0 %v1660
    %v1890 = vpop.f32.mrf.mxu0
    %v1891 = vadd.f32 %v1550, %v1890
    %v1892 = vpop.f32.mrf.mxu0
    %v1893 = vpop.f32.mrf.mxu0
    %v1894 = vadd.f32 %v1550, %v1893
    %v1895 = vpop.f32.mrf.mxu0
    %1896 = vmatprep.mubr.bf16.mxu0 %v1663
    %1897 = vmatmul.mubr.bf16.gmra.mxu0 %v1662
    %v1898 = vpop.f32.mrf.mxu0
    %v1899 = vadd.f32 %v1550, %v1898
    %v1900 = vpop.f32.mrf.mxu0
    %v1901 = vpop.f32.mrf.mxu0
    %v1902 = vadd.f32 %v1550, %v1901
    %v1903 = vpop.f32.mrf.mxu0
    %1904 = vmatprep.mubr.bf16.mxu0 %v1665
    %1905 = vmatmul.mubr.bf16.gmra.mxu0 %v1664
    %v1906 = vpop.f32.mrf.mxu0
    %v1907 = vadd.f32 %v1550, %v1906
    %v1908 = vpop.f32.mrf.mxu0
    %v1909 = vpop.f32.mrf.mxu0
    %v1910 = vadd.f32 %v1550, %v1909
    %v1911 = vpop.f32.mrf.mxu0
    %1912 = vmatprep.mubr.bf16.mxu0 %v1667
    %1913 = vmatmul.mubr.bf16.gmra.mxu0 %v1666
    %v1914 = vpop.f32.mrf.mxu0
    %v1915 = vadd.f32 %v1550, %v1914
    %v1916 = vpop.f32.mrf.mxu0
    %v1917 = vpop.f32.mrf.mxu0
    %v1918 = vadd.f32 %v1550, %v1917
    %v1919 = vpop.f32.mrf.mxu0
    %1920 = vmatprep.mubr.bf16.mxu0 %v1669
    %1921 = vmatmul.mubr.bf16.gmra.mxu0 %v1668
    %v1922 = vpop.f32.mrf.mxu0
    %v1923 = vadd.f32 %v1550, %v1922
    %v1924 = vpop.f32.mrf.mxu0
    %v1925 = vpop.f32.mrf.mxu0
    %v1926 = vadd.f32 %v1550, %v1925
    %v1927 = vpop.f32.mrf.mxu0
    %1928 = vmatprep.mubr.bf16.mxu0 %v1671
    %1929 = vmatmul.mubr.bf16.gmra.mxu0 %v1670
    %v1930 = vpop.f32.mrf.mxu0
    %v1931 = vadd.f32 %v1550, %v1930
    %v1932 = vpop.f32.mrf.mxu0
    %v1933 = vpop.f32.mrf.mxu0
    %v1934 = vadd.f32 %v1550, %v1933
    %v1935 = vpop.f32.mrf.mxu0
    %1936 = vmatprep.mubr.bf16.mxu0 %v1673
    %1937 = vmatmul.mubr.bf16.gmra.mxu0 %v1672
    %v1938 = vpop.f32.mrf.mxu0
    %v1939 = vadd.f32 %v1550, %v1938
    %v1940 = vpop.f32.mrf.mxu0
    %v1941 = vpop.f32.mrf.mxu0
    %v1942 = vadd.f32 %v1550, %v1941
    %v1943 = vpop.f32.mrf.mxu0
    %1944 = vmatprep.mubr.bf16.mxu0 %v1675
    %1945 = vmatmul.mubr.bf16.gmra.mxu0 %v1674
    %v1946 = vpop.f32.mrf.mxu0
    %v1947 = vadd.f32 %v1550, %v1946
    %v1948 = vpop.f32.mrf.mxu0
    %v1949 = vpop.f32.mrf.mxu0
    %v1950 = vadd.f32 %v1550, %v1949
    %v1951 = vpop.f32.mrf.mxu0
    %1952 = vmatprep.mubr.bf16.mxu0 %v1677
    %1953 = vmatmul.mubr.bf16.gmra.mxu0 %v1676
    %v1954 = vpop.f32.mrf.mxu0
    %v1955 = vadd.f32 %v1550, %v1954
    %v1956 = vpop.f32.mrf.mxu0
    %v1957 = vpop.f32.mrf.mxu0
    %v1958 = vadd.f32 %v1550, %v1957
    %v1959 = vpop.f32.mrf.mxu0
    %1960 = vmatprep.mubr.bf16.mxu0 %v1679
    %1961 = vmatmul.mubr.bf16.gmra.mxu0 %v1678
    %v1962 = vpop.f32.mrf.mxu0
    %v1963 = vadd.f32 %v1550, %v1962
    %v1964 = vpop.f32.mrf.mxu0
    %v1965 = vpop.f32.mrf.mxu0
    %v1966 = vadd.f32 %v1550, %v1965
    %v1967 = vpop.f32.mrf.mxu0
    %1968 = vdwg.mxu0
    %v1969 = vmax.f32 %v1843, 0.0
    %v1970 = vmax.f32 %v1846, 0.0
    %v1971 = vmax.f32 %v1851, 0.0
    %v1972 = vmax.f32 %v1854, 0.0
    %v1973 = vmax.f32 %v1859, 0.0
    %v1974 = vmax.f32 %v1862, 0.0
    %v1975 = vmax.f32 %v1867, 0.0
    %v1976 = vmax.f32 %v1870, 0.0
    %v1977 = vmax.f32 %v1875, 0.0
    %v1978 = vmax.f32 %v1878, 0.0
    %v1979 = vmax.f32 %v1883, 0.0
    %v1980 = vmax.f32 %v1886, 0.0
    %v1981 = vmax.f32 %v1891, 0.0
    %v1982 = vmax.f32 %v1894, 0.0
    %v1983 = vmax.f32 %v1899, 0.0
    %v1984 = vmax.f32 %v1902, 0.0
    %v1985 = vmax.f32 %v1907, 0.0
    %v1986 = vmax.f32 %v1910, 0.0
    %v1987 = vmax.f32 %v1915, 0.0
    %v1988 = vmax.f32 %v1918, 0.0
    %v1989 = vmax.f32 %v1923, 0.0
    %v1990 = vmax.f32 %v1926, 0.0
    %v1991 = vmax.f32 %v1931, 0.0
    %v1992 = vmax.f32 %v1934, 0.0
    %v1993 = vmax.f32 %v1939, 0.0
    %v1994 = vmax.f32 %v1942, 0.0
    %v1995 = vmax.f32 %v1947, 0.0
    %v1996 = vmax.f32 %v1950, 0.0
    %v1997 = vmax.f32 %v1955, 0.0
    %v1998 = vmax.f32 %v1958, 0.0
    %v1999 = vmax.f32 %v1963, 0.0
    %v2000 = vmax.f32 %v1966, 0.0
    %v2001 = vpack.c.bf16 %v1970, %v1969
    %v2002 = vpack.c.bf16 %v1972, %v1971
    %v2003 = vpack.c.bf16 %v1974, %v1973
    %v2004 = vpack.c.bf16 %v1976, %v1975
    %v2005 = vpack.c.bf16 %v1978, %v1977
    %v2006 = vpack.c.bf16 %v1980, %v1979
    %v2007 = vpack.c.bf16 %v1982, %v1981
    %v2008 = vpack.c.bf16 %v1984, %v1983
    %v2009 = vpack.c.bf16 %v1986, %v1985
    %v2010 = vpack.c.bf16 %v1988, %v1987
    %v2011 = vpack.c.bf16 %v1990, %v1989
    %v2012 = vpack.c.bf16 %v1992, %v1991
    %v2013 = vpack.c.bf16 %v1994, %v1993
    %v2014 = vpack.c.bf16 %v1996, %v1995
    %v2015 = vpack.c.bf16 %v1998, %v1997
    %v2016 = vpack.c.bf16 %v2000, %v1999
    %v2017 = vld [vmem:[#allocation9] sm:$0xf]
    %v2018 = vld [vmem:[#allocation9 + $0x4] sm:$0xf]
    %v2019 = vld [vmem:[#allocation9 + $0x8] sm:$0xf]
    %v2020 = vld [vmem:[#allocation9 + $0xc] sm:$0xf]
    %v2021 = vld [vmem:[#allocation9 + $0x10] sm:$0xf]
    %v2022 = vld [vmem:[#allocation9 + $0x14] sm:$0xf]
    %v2023 = vld [vmem:[#allocation9 + $0x18] sm:$0xf]
    %v2024 = vld [vmem:[#allocation9 + $0x1c] sm:$0xf]
    %v2025 = vld [vmem:[#allocation9 + $0x20] sm:$0xf]
    %v2026 = vld [vmem:[#allocation9 + $0x24] sm:$0xf]
    %v2027 = vld [vmem:[#allocation9 + $0x28] sm:$0xf]
    %v2028 = vld [vmem:[#allocation9 + $0x2c] sm:$0xf]
    %v2029 = vld [vmem:[#allocation9 + $0x30] sm:$0xf]
    %v2030 = vld [vmem:[#allocation9 + $0x34] sm:$0xf]
    %v2031 = vld [vmem:[#allocation9 + $0x38] sm:$0xf]
    %v2032 = vld [vmem:[#allocation9 + $0x3c] sm:$0xf]
    %v2049 = vunpack.c.l.b16 %v2017
    %v2050 = vunpack.c.l.b16 %v2018
    %v2051 = vunpack.c.l.b16 %v2019
    %v2052 = vunpack.c.l.b16 %v2020
    %v2053 = vunpack.c.l.b16 %v2021
    %v2054 = vunpack.c.l.b16 %v2022
    %v2055 = vunpack.c.l.b16 %v2023
    %v2056 = vunpack.c.l.b16 %v2024
    %v2057 = vunpack.c.l.b16 %v2025
    %v2058 = vunpack.c.l.b16 %v2026
    %v2059 = vunpack.c.l.b16 %v2027
    %v2060 = vunpack.c.l.b16 %v2028
    %v2061 = vunpack.c.l.b16 %v2029
    %v2062 = vunpack.c.l.b16 %v2030
    %v2063 = vunpack.c.l.b16 %v2031
    %v2064 = vunpack.c.l.b16 %v2032
    %v2065 = vpack.c.b16 %v2050, %v2049
    %v2066 = vpack.c.b16 %v2052, %v2051
    %v2067 = vpack.c.b16 %v2054, %v2053
    %v2068 = vpack.c.b16 %v2056, %v2055
    %v2069 = vpack.c.b16 %v2058, %v2057
    %v2070 = vpack.c.b16 %v2060, %v2059
    %v2071 = vpack.c.b16 %v2062, %v2061
    %v2072 = vpack.c.b16 %v2064, %v2063
    %2081 = vmatprep.subr.bf16.mxu0 0
    %2082 = vmatpush1.bf16.msra.mxu0 %v2072
    %2083 = vmatprep.subr.bf16.mxu0 0
    %2084 = vmatpush1.bf16.msra.mxu0 %v2071
    %2085 = vmatprep.subr.bf16.mxu0 0
    %2086 = vmatpush1.bf16.msra.mxu0 %v2070
    %2087 = vmatprep.subr.bf16.mxu0 0
    %2088 = vmatpush1.bf16.msra.mxu0 %v2069
    %2089 = vmatprep.subr.bf16.mxu0 0
    %2090 = vmatpush1.bf16.msra.mxu0 %v2068
    %2091 = vmatprep.subr.bf16.mxu0 0
    %2092 = vmatpush1.bf16.msra.mxu0 %v2067
    %2093 = vmatprep.subr.bf16.mxu0 0
    %2094 = vmatpush1.bf16.msra.mxu0 %v2066
    %2095 = vmatprep.subr.bf16.mxu0 0
    %2096 = vmatpush1.bf16.msra.mxu0 %v2065
    %2097 = vmatprep.subr.bf16.mxu0 0
    %2098 = vmatpush2.bf16.msra.mxu0 0
    %2099 = vmatprep.subr.bf16.mxu0 0
    %2100 = vmatpush2.bf16.msra.mxu0 0
    %2101 = vmatprep.subr.bf16.mxu0 0
    %2102 = vmatpush2.bf16.msra.mxu0 0
    %2103 = vmatprep.subr.bf16.mxu0 0
    %2104 = vmatpush2.bf16.msra.mxu0 0
    %2105 = vmatprep.subr.bf16.mxu0 0
    %2106 = vmatpush2.bf16.msra.mxu0 0
    %2107 = vmatprep.subr.bf16.mxu0 0
    %2108 = vmatpush2.bf16.msra.mxu0 0
    %2109 = vmatprep.subr.bf16.mxu0 0
    %2110 = vmatpush2.bf16.msra.mxu0 0
    %2111 = vmatprep.subr.bf16.mxu0 0
    %2112 = vmatpush2.bf16.msra.mxu0 0
    %2113 = vmatprep.mubr.bf16.mxu0 0
    %2114 = vmatmul.mubr.bf16.gmra.mxu0 %v2001
    %v2115 = vpop.f32.mrf.mxu0
    %v2116 = vadd.f32 0.0, %v2115
    %v2117 = vpop.f32.mrf.mxu0
    %v2118 = vpop.f32.mrf.mxu0
    %v2119 = vadd.f32 0.0, %v2118
    %v2120 = vpop.f32.mrf.mxu0
    %2121 = vmatprep.mubr.bf16.mxu0 0
    %2122 = vmatmul.mubr.bf16.gmra.mxu0 %v2002
    %v2123 = vpop.f32.mrf.mxu0
    %v2124 = vadd.f32 0.0, %v2123
    %v2125 = vpop.f32.mrf.mxu0
    %v2126 = vpop.f32.mrf.mxu0
    %v2127 = vadd.f32 0.0, %v2126
    %v2128 = vpop.f32.mrf.mxu0
    %2129 = vmatprep.mubr.bf16.mxu0 0
    %2130 = vmatmul.mubr.bf16.gmra.mxu0 %v2003
    %v2131 = vpop.f32.mrf.mxu0
    %v2132 = vadd.f32 0.0, %v2131
    %v2133 = vpop.f32.mrf.mxu0
    %v2134 = vpop.f32.mrf.mxu0
    %v2135 = vadd.f32 0.0, %v2134
    %v2136 = vpop.f32.mrf.mxu0
    %2137 = vmatprep.mubr.bf16.mxu0 0
    %2138 = vmatmul.mubr.bf16.gmra.mxu0 %v2004
    %v2139 = vpop.f32.mrf.mxu0
    %v2140 = vadd.f32 0.0, %v2139
    %v2141 = vpop.f32.mrf.mxu0
    %v2142 = vpop.f32.mrf.mxu0
    %v2143 = vadd.f32 0.0, %v2142
    %v2144 = vpop.f32.mrf.mxu0
    %2145 = vmatprep.mubr.bf16.mxu0 0
    %2146 = vmatmul.mubr.bf16.gmra.mxu0 %v2005
    %v2147 = vpop.f32.mrf.mxu0
    %v2148 = vadd.f32 0.0, %v2147
    %v2149 = vpop.f32.mrf.mxu0
    %v2150 = vpop.f32.mrf.mxu0
    %v2151 = vadd.f32 0.0, %v2150
    %v2152 = vpop.f32.mrf.mxu0
    %2153 = vmatprep.mubr.bf16.mxu0 0
    %2154 = vmatmul.mubr.bf16.gmra.mxu0 %v2006
    %v2155 = vpop.f32.mrf.mxu0
    %v2156 = vadd.f32 0.0, %v2155
    %v2157 = vpop.f32.mrf.mxu0
    %v2158 = vpop.f32.mrf.mxu0
    %v2159 = vadd.f32 0.0, %v2158
    %v2160 = vpop.f32.mrf.mxu0
    %2161 = vmatprep.mubr.bf16.mxu0 0
    %2162 = vmatmul.mubr.bf16.gmra.mxu0 %v2007
    %v2163 = vpop.f32.mrf.mxu0
    %v2164 = vadd.f32 0.0, %v2163
    %v2165 = vpop.f32.mrf.mxu0
    %v2166 = vpop.f32.mrf.mxu0
    %v2167 = vadd.f32 0.0, %v2166
    %v2168 = vpop.f32.mrf.mxu0
    %2169 = vmatprep.mubr.bf16.mxu0 0
    %2170 = vmatmul.mubr.bf16.gmra.mxu0 %v2008
    %v2171 = vpop.f32.mrf.mxu0
    %v2172 = vadd.f32 0.0, %v2171
    %v2173 = vpop.f32.mrf.mxu0
    %v2174 = vpop.f32.mrf.mxu0
    %v2175 = vadd.f32 0.0, %v2174
    %v2176 = vpop.f32.mrf.mxu0
    %2177 = vmatprep.mubr.bf16.mxu0 0
    %2178 = vmatmul.mubr.bf16.gmra.mxu0 %v2009
    %v2179 = vpop.f32.mrf.mxu0
    %v2180 = vadd.f32 0.0, %v2179
    %v2181 = vpop.f32.mrf.mxu0
    %v2182 = vpop.f32.mrf.mxu0
    %v2183 = vadd.f32 0.0, %v2182
    %v2184 = vpop.f32.mrf.mxu0
    %2185 = vmatprep.mubr.bf16.mxu0 0
    %2186 = vmatmul.mubr.bf16.gmra.mxu0 %v2010
    %v2187 = vpop.f32.mrf.mxu0
    %v2188 = vadd.f32 0.0, %v2187
    %v2189 = vpop.f32.mrf.mxu0
    %v2190 = vpop.f32.mrf.mxu0
    %v2191 = vadd.f32 0.0, %v2190
    %v2192 = vpop.f32.mrf.mxu0
    %2193 = vmatprep.mubr.bf16.mxu0 0
    %2194 = vmatmul.mubr.bf16.gmra.mxu0 %v2011
    %v2195 = vpop.f32.mrf.mxu0
    %v2196 = vadd.f32 0.0, %v2195
    %v2197 = vpop.f32.mrf.mxu0
    %v2198 = vpop.f32.mrf.mxu0
    %v2199 = vadd.f32 0.0, %v2198
    %v2200 = vpop.f32.mrf.mxu0
    %2201 = vmatprep.mubr.bf16.mxu0 0
    %2202 = vmatmul.mubr.bf16.gmra.mxu0 %v2012
    %v2203 = vpop.f32.mrf.mxu0
    %v2204 = vadd.f32 0.0, %v2203
    %v2205 = vpop.f32.mrf.mxu0
    %v2206 = vpop.f32.mrf.mxu0
    %v2207 = vadd.f32 0.0, %v2206
    %v2208 = vpop.f32.mrf.mxu0
    %2209 = vmatprep.mubr.bf16.mxu0 0
    %2210 = vmatmul.mubr.bf16.gmra.mxu0 %v2013
    %v2211 = vpop.f32.mrf.mxu0
    %v2212 = vadd.f32 0.0, %v2211
    %v2213 = vpop.f32.mrf.mxu0
    %v2214 = vpop.f32.mrf.mxu0
    %v2215 = vadd.f32 0.0, %v2214
    %v2216 = vpop.f32.mrf.mxu0
    %2217 = vmatprep.mubr.bf16.mxu0 0
    %2218 = vmatmul.mubr.bf16.gmra.mxu0 %v2014
    %v2219 = vpop.f32.mrf.mxu0
    %v2220 = vadd.f32 0.0, %v2219
    %v2221 = vpop.f32.mrf.mxu0
    %v2222 = vpop.f32.mrf.mxu0
    %v2223 = vadd.f32 0.0, %v2222
    %v2224 = vpop.f32.mrf.mxu0
    %2225 = vmatprep.mubr.bf16.mxu0 0
    %2226 = vmatmul.mubr.bf16.gmra.mxu0 %v2015
    %v2227 = vpop.f32.mrf.mxu0
    %v2228 = vadd.f32 0.0, %v2227
    %v2229 = vpop.f32.mrf.mxu0
    %v2230 = vpop.f32.mrf.mxu0
    %v2231 = vadd.f32 0.0, %v2230
    %v2232 = vpop.f32.mrf.mxu0
    %2233 = vmatprep.mubr.bf16.mxu0 0
    %2234 = vmatmul.mubr.bf16.gmra.mxu0 %v2016
    %v2235 = vpop.f32.mrf.mxu0
    %v2236 = vadd.f32 0.0, %v2235
    %v2237 = vpop.f32.mrf.mxu0
    %v2238 = vpop.f32.mrf.mxu0
    %v2239 = vadd.f32 0.0, %v2238
    %v2240 = vpop.f32.mrf.mxu0
    %2241 = vdwg.mxu0
    %v2242 = vpack.c.bf16 %v2119, %v2116
    %v2243 = vpack.c.bf16 %v2127, %v2124
    %v2244 = vpack.c.bf16 %v2135, %v2132
    %v2245 = vpack.c.bf16 %v2143, %v2140
    %v2246 = vpack.c.bf16 %v2151, %v2148
    %v2247 = vpack.c.bf16 %v2159, %v2156
    %v2248 = vpack.c.bf16 %v2167, %v2164
    %v2249 = vpack.c.bf16 %v2175, %v2172
    %v2250 = vpack.c.bf16 %v2183, %v2180
    %v2251 = vpack.c.bf16 %v2191, %v2188
    %v2252 = vpack.c.bf16 %v2199, %v2196
    %v2253 = vpack.c.bf16 %v2207, %v2204
    %v2254 = vpack.c.bf16 %v2215, %v2212
    %v2255 = vpack.c.bf16 %v2223, %v2220
    %v2256 = vpack.c.bf16 %v2231, %v2228
    %v2257 = vpack.c.bf16 %v2239, %v2236
    %v2258 = vld [vmem:[%s6] sm:$0x1]
    %v2260 = vlaneseq
    %v2261 = vshrl.u32 %v2260, 7
    %v2262 = vsub.s32 0, %v2261
    %v2263 = vrot.slane %v2258, %v2262
    %2265 = vmatprep.subr.bf16.mxu0 0
    %2266 = vmatpush1.bf16.msra.mxu0 %v2249
    %2267 = vmatprep.subr.bf16.mxu0 0
    %2268 = vmatpush1.bf16.msra.mxu0 %v2248
    %2269 = vmatprep.subr.bf16.mxu0 0
    %2270 = vmatpush1.bf16.msra.mxu0 %v2247
    %2271 = vmatprep.subr.bf16.mxu0 0
    %2272 = vmatpush1.bf16.msra.mxu0 %v2246
    %2273 = vmatprep.subr.bf16.mxu0 0
    %2274 = vmatpush1.bf16.msra.mxu0 %v2245
    %2275 = vmatprep.subr.bf16.mxu0 0
    %2276 = vmatpush1.bf16.msra.mxu0 %v2244
    %2277 = vmatprep.subr.bf16.mxu0 0
    %2278 = vmatpush1.bf16.msra.mxu0 %v2243
    %2279 = vmatprep.subr.bf16.mxu0 0
    %2280 = vmatpush1.bf16.msra.mxu0 %v2242
    %2281 = vmatprep.subr.bf16.mxu0 0
    %2282 = vmatpush2.bf16.msra.mxu0 %v2257
    %2283 = vmatprep.subr.bf16.mxu0 0
    %2284 = vmatpush2.bf16.msra.mxu0 %v2256
    %2285 = vmatprep.subr.bf16.mxu0 0
    %2286 = vmatpush2.bf16.msra.mxu0 %v2255
    %2287 = vmatprep.subr.bf16.mxu0 0
    %2288 = vmatpush2.bf16.msra.mxu0 %v2254
    %2289 = vmatprep.subr.bf16.mxu0 0
    %2290 = vmatpush2.bf16.msra.mxu0 %v2253
    %2291 = vmatprep.subr.bf16.mxu0 0
    %2292 = vmatpush2.bf16.msra.mxu0 %v2252
    %2293 = vmatprep.subr.bf16.mxu0 0
    %2294 = vmatpush2.bf16.msra.mxu0 %v2251
    %2295 = vmatprep.subr.bf16.mxu0 0
    %2296 = vmatpush2.bf16.msra.mxu0 %v2250
    %2297 = vmatprep.mubr.bf16.mxu0 %v1649
    %2298 = vmatmul.mubr.bf16.gmra.mxu0 %v1648
    %v2299 = vpop.f32.mrf.mxu0
    %v2300 = vadd.f32 %v2263, %v2299
    %v2301 = vpop.f32.mrf.mxu0
    %v2302 = vpop.f32.mrf.mxu0
    %v2303 = vadd.f32 %v2263, %v2302
    %v2304 = vpop.f32.mrf.mxu0
    %2305 = vmatprep.mubr.bf16.mxu0 %v1651
    %2306 = vmatmul.mubr.bf16.gmra.mxu0 %v1650
    %v2307 = vpop.f32.mrf.mxu0
    %v2308 = vadd.f32 %v2263, %v2307
    %v2309 = vpop.f32.mrf.mxu0
    %v2310 = vpop.f32.mrf.mxu0
    %v2311 = vadd.f32 %v2263, %v2310
    %v2312 = vpop.f32.mrf.mxu0
    %2313 = vmatprep.mubr.bf16.mxu0 %v1653
    %2314 = vmatmul.mubr.bf16.gmra.mxu0 %v1652
    %v2315 = vpop.f32.mrf.mxu0
    %v2316 = vadd.f32 %v2263, %v2315
    %v2317 = vpop.f32.mrf.mxu0
    %v2318 = vpop.f32.mrf.mxu0
    %v2319 = vadd.f32 %v2263, %v2318
    %v2320 = vpop.f32.mrf.mxu0
    %2321 = vmatprep.mubr.bf16.mxu0 %v1655
    %2322 = vmatmul.mubr.bf16.gmra.mxu0 %v1654
    %v2323 = vpop.f32.mrf.mxu0
    %v2324 = vadd.f32 %v2263, %v2323
    %v2325 = vpop.f32.mrf.mxu0
    %v2326 = vpop.f32.mrf.mxu0
    %v2327 = vadd.f32 %v2263, %v2326
    %v2328 = vpop.f32.mrf.mxu0
    %2329 = vmatprep.mubr.bf16.mxu0 %v1657
    %2330 = vmatmul.mubr.bf16.gmra.mxu0 %v1656
    %v2331 = vpop.f32.mrf.mxu0
    %v2332 = vadd.f32 %v2263, %v2331
    %v2333 = vpop.f32.mrf.mxu0
    %v2334 = vpop.f32.mrf.mxu0
    %v2335 = vadd.f32 %v2263, %v2334
    %v2336 = vpop.f32.mrf.mxu0
    %2337 = vmatprep.mubr.bf16.mxu0 %v1659
    %2338 = vmatmul.mubr.bf16.gmra.mxu0 %v1658
    %v2339 = vpop.f32.mrf.mxu0
    %v2340 = vadd.f32 %v2263, %v2339
    %v2341 = vpop.f32.mrf.mxu0
    %v2342 = vpop.f32.mrf.mxu0
    %v2343 = vadd.f32 %v2263, %v2342
    %v2344 = vpop.f32.mrf.mxu0
    %2345 = vmatprep.mubr.bf16.mxu0 %v1661
    %2346 = vmatmul.mubr.bf16.gmra.mxu0 %v1660
    %v2347 = vpop.f32.mrf.mxu0
    %v2348 = vadd.f32 %v2263, %v2347
    %v2349 = vpop.f32.mrf.mxu0
    %v2350 = vpop.f32.mrf.mxu0
    %v2351 = vadd.f32 %v2263, %v2350
    %v2352 = vpop.f32.mrf.mxu0
    %2353 = vmatprep.mubr.bf16.mxu0 %v1663
    %2354 = vmatmul.mubr.bf16.gmra.mxu0 %v1662
    %v2355 = vpop.f32.mrf.mxu0
    %v2356 = vadd.f32 %v2263, %v2355
    %v2357 = vpop.f32.mrf.mxu0
    %v2358 = vpop.f32.mrf.mxu0
    %v2359 = vadd.f32 %v2263, %v2358
    %v2360 = vpop.f32.mrf.mxu0
    %2361 = vmatprep.mubr.bf16.mxu0 %v1665
    %2362 = vmatmul.mubr.bf16.gmra.mxu0 %v1664
    %v2363 = vpop.f32.mrf.mxu0
    %v2364 = vadd.f32 %v2263, %v2363
    %v2365 = vpop.f32.mrf.mxu0
    %v2366 = vpop.f32.mrf.mxu0
    %v2367 = vadd.f32 %v2263, %v2366
    %v2368 = vpop.f32.mrf.mxu0
    %2369 = vmatprep.mubr.bf16.mxu0 %v1667
    %2370 = vmatmul.mubr.bf16.gmra.mxu0 %v1666
    %v2371 = vpop.f32.mrf.mxu0
    %v2372 = vadd.f32 %v2263, %v2371
    %v2373 = vpop.f32.mrf.mxu0
    %v2374 = vpop.f32.mrf.mxu0
    %v2375 = vadd.f32 %v2263, %v2374
    %v2376 = vpop.f32.mrf.mxu0
    %2377 = vmatprep.mubr.bf16.mxu0 %v1669
    %2378 = vmatmul.mubr.bf16.gmra.mxu0 %v1668
    %v2379 = vpop.f32.mrf.mxu0
    %v2380 = vadd.f32 %v2263, %v2379
    %v2381 = vpop.f32.mrf.mxu0
    %v2382 = vpop.f32.mrf.mxu0
    %v2383 = vadd.f32 %v2263, %v2382
    %v2384 = vpop.f32.mrf.mxu0
    %2385 = vmatprep.mubr.bf16.mxu0 %v1671
    %2386 = vmatmul.mubr.bf16.gmra.mxu0 %v1670
    %v2387 = vpop.f32.mrf.mxu0
    %v2388 = vadd.f32 %v2263, %v2387
    %v2389 = vpop.f32.mrf.mxu0
    %v2390 = vpop.f32.mrf.mxu0
    %v2391 = vadd.f32 %v2263, %v2390
    %v2392 = vpop.f32.mrf.mxu0
    %2393 = vmatprep.mubr.bf16.mxu0 %v1673
    %2394 = vmatmul.mubr.bf16.gmra.mxu0 %v1672
    %v2395 = vpop.f32.mrf.mxu0
    %v2396 = vadd.f32 %v2263, %v2395
    %v2397 = vpop.f32.mrf.mxu0
    %v2398 = vpop.f32.mrf.mxu0
    %v2399 = vadd.f32 %v2263, %v2398
    %v2400 = vpop.f32.mrf.mxu0
    %2401 = vmatprep.mubr.bf16.mxu0 %v1675
    %2402 = vmatmul.mubr.bf16.gmra.mxu0 %v1674
    %v2403 = vpop.f32.mrf.mxu0
    %v2404 = vadd.f32 %v2263, %v2403
    %v2405 = vpop.f32.mrf.mxu0
    %v2406 = vpop.f32.mrf.mxu0
    %v2407 = vadd.f32 %v2263, %v2406
    %v2408 = vpop.f32.mrf.mxu0
    %2409 = vmatprep.mubr.bf16.mxu0 %v1677
    %2410 = vmatmul.mubr.bf16.gmra.mxu0 %v1676
    %v2411 = vpop.f32.mrf.mxu0
    %v2412 = vadd.f32 %v2263, %v2411
    %v2413 = vpop.f32.mrf.mxu0
    %v2414 = vpop.f32.mrf.mxu0
    %v2415 = vadd.f32 %v2263, %v2414
    %v2416 = vpop.f32.mrf.mxu0
    %2417 = vmatprep.mubr.bf16.mxu0 %v1679
    %2418 = vmatmul.mubr.bf16.gmra.mxu0 %v1678
    %v2419 = vpop.f32.mrf.mxu0
    %v2420 = vadd.f32 %v2263, %v2419
    %v2421 = vpop.f32.mrf.mxu0
    %v2422 = vpop.f32.mrf.mxu0
    %v2423 = vadd.f32 %v2263, %v2422
    %v2424 = vpop.f32.mrf.mxu0
    %2425 = vdwg.mxu0
    %v2426 = vmax.f32 %v2300, 0.0
    %v2427 = vmax.f32 %v2303, 0.0
    %v2428 = vmax.f32 %v2308, 0.0
    %v2429 = vmax.f32 %v2311, 0.0
    %v2430 = vmax.f32 %v2316, 0.0
    %v2431 = vmax.f32 %v2319, 0.0
    %v2432 = vmax.f32 %v2324, 0.0
    %v2433 = vmax.f32 %v2327, 0.0
    %v2434 = vmax.f32 %v2332, 0.0
    %v2435 = vmax.f32 %v2335, 0.0
    %v2436 = vmax.f32 %v2340, 0.0
    %v2437 = vmax.f32 %v2343, 0.0
    %v2438 = vmax.f32 %v2348, 0.0
    %v2439 = vmax.f32 %v2351, 0.0
    %v2440 = vmax.f32 %v2356, 0.0
    %v2441 = vmax.f32 %v2359, 0.0
    %v2442 = vmax.f32 %v2364, 0.0
    %v2443 = vmax.f32 %v2367, 0.0
    %v2444 = vmax.f32 %v2372, 0.0
    %v2445 = vmax.f32 %v2375, 0.0
    %v2446 = vmax.f32 %v2380, 0.0
    %v2447 = vmax.f32 %v2383, 0.0
    %v2448 = vmax.f32 %v2388, 0.0
    %v2449 = vmax.f32 %v2391, 0.0
    %v2450 = vmax.f32 %v2396, 0.0
    %v2451 = vmax.f32 %v2399, 0.0
    %v2452 = vmax.f32 %v2404, 0.0
    %v2453 = vmax.f32 %v2407, 0.0
    %v2454 = vmax.f32 %v2412, 0.0
    %v2455 = vmax.f32 %v2415, 0.0
    %v2456 = vmax.f32 %v2420, 0.0
    %v2457 = vmax.f32 %v2423, 0.0
    %v2458 = vlaneseq
    %v2459 = vand.u32 %v2458, 127
    %vm2460 = vcmp.lt.s32.totalorder %v2459, 2
    %v2461 = vsel %vm2460, %v2426, -inf
    %v2462 = vsel %vm2460, %v2427, -inf
    %v2463 = vsel %vm2460, %v2428, -inf
    %v2464 = vsel %vm2460, %v2429, -inf
    %v2465 = vsel %vm2460, %v2430, -inf
    %v2466 = vsel %vm2460, %v2431, -inf
    %v2467 = vsel %vm2460, %v2432, -inf
    %v2468 = vsel %vm2460, %v2433, -inf
    %v2469 = vsel %vm2460, %v2434, -inf
    %v2470 = vsel %vm2460, %v2435, -inf
    %v2471 = vsel %vm2460, %v2436, -inf
    %v2472 = vsel %vm2460, %v2437, -inf
    %v2473 = vsel %vm2460, %v2438, -inf
    %v2474 = vsel %vm2460, %v2439, -inf
    %v2475 = vsel %vm2460, %v2440, -inf
    %v2476 = vsel %vm2460, %v2441, -inf
    %v2477 = vsel %vm2460, %v2442, -inf
    %v2478 = vsel %vm2460, %v2443, -inf
    %v2479 = vsel %vm2460, %v2444, -inf
    %v2480 = vsel %vm2460, %v2445, -inf
    %v2481 = vsel %vm2460, %v2446, -inf
    %v2482 = vsel %vm2460, %v2447, -inf
    %v2483 = vsel %vm2460, %v2448, -inf
    %v2484 = vsel %vm2460, %v2449, -inf
    %v2485 = vsel %vm2460, %v2450, -inf
    %v2486 = vsel %vm2460, %v2451, -inf
    %v2487 = vsel %vm2460, %v2452, -inf
    %v2488 = vsel %vm2460, %v2453, -inf
    %v2489 = vsel %vm2460, %v2454, -inf
    %v2490 = vsel %vm2460, %v2455, -inf
    %v2491 = vsel %vm2460, %v2456, -inf
    %v2492 = vsel %vm2460, %v2457, -inf
    %2493 = vmax.xlane.f32.xlu0 %v2461
    %v2494 = vpop.xlane.xlu0 %2493
    %2495 = vmax.xlane.f32.xlu0 %v2462
    %v2496 = vpop.xlane.xlu0 %2495
    %2497 = vmax.xlane.f32.xlu0 %v2463
    %v2498 = vpop.xlane.xlu0 %2497
    %2499 = vmax.xlane.f32.xlu0 %v2464
    %v2500 = vpop.xlane.xlu0 %2499
    %2501 = vmax.xlane.f32.xlu0 %v2465
    %v2502 = vpop.xlane.xlu0 %2501
    %2503 = vmax.xlane.f32.xlu0 %v2466
    %v2504 = vpop.xlane.xlu0 %2503
    %2505 = vmax.xlane.f32.xlu0 %v2467
    %v2506 = vpop.xlane.xlu0 %2505
    %2507 = vmax.xlane.f32.xlu0 %v2468
    %v2508 = vpop.xlane.xlu0 %2507
    %2509 = vmax.xlane.f32.xlu0 %v2469
    %v2510 = vpop.xlane.xlu0 %2509
    %2511 = vmax.xlane.f32.xlu0 %v2470
    %v2512 = vpop.xlane.xlu0 %2511
    %2513 = vmax.xlane.f32.xlu0 %v2471
    %v2514 = vpop.xlane.xlu0 %2513
    %2515 = vmax.xlane.f32.xlu0 %v2472
    %v2516 = vpop.xlane.xlu0 %2515
    %2517 = vmax.xlane.f32.xlu0 %v2473
    %v2518 = vpop.xlane.xlu0 %2517
    %2519 = vmax.xlane.f32.xlu0 %v2474
    %v2520 = vpop.xlane.xlu0 %2519
    %2521 = vmax.xlane.f32.xlu0 %v2475
    %v2522 = vpop.xlane.xlu0 %2521
    %2523 = vmax.xlane.f32.xlu0 %v2476
    %v2524 = vpop.xlane.xlu0 %2523
    %2525 = vmax.xlane.f32.xlu0 %v2477
    %v2526 = vpop.xlane.xlu0 %2525
    %2527 = vmax.xlane.f32.xlu0 %v2478
    %v2528 = vpop.xlane.xlu0 %2527
    %2529 = vmax.xlane.f32.xlu0 %v2479
    %v2530 = vpop.xlane.xlu0 %2529
    %2531 = vmax.xlane.f32.xlu0 %v2480
    %v2532 = vpop.xlane.xlu0 %2531
    %2533 = vmax.xlane.f32.xlu0 %v2481
    %v2534 = vpop.xlane.xlu0 %2533
    %2535 = vmax.xlane.f32.xlu0 %v2482
    %v2536 = vpop.xlane.xlu0 %2535
    %2537 = vmax.xlane.f32.xlu0 %v2483
    %v2538 = vpop.xlane.xlu0 %2537
    %2539 = vmax.xlane.f32.xlu0 %v2484
    %v2540 = vpop.xlane.xlu0 %2539
    %2541 = vmax.xlane.f32.xlu0 %v2485
    %v2542 = vpop.xlane.xlu0 %2541
    %2543 = vmax.xlane.f32.xlu0 %v2486
    %v2544 = vpop.xlane.xlu0 %2543
    %2545 = vmax.xlane.f32.xlu0 %v2487
    %v2546 = vpop.xlane.xlu0 %2545
    %2547 = vmax.xlane.f32.xlu0 %v2488
    %v2548 = vpop.xlane.xlu0 %2547
    %2549 = vmax.xlane.f32.xlu0 %v2489
    %v2550 = vpop.xlane.xlu0 %2549
    %2551 = vmax.xlane.f32.xlu0 %v2490
    %v2552 = vpop.xlane.xlu0 %2551
    %2553 = vmax.xlane.f32.xlu0 %v2491
    %v2554 = vpop.xlane.xlu0 %2553
    %2555 = vmax.xlane.f32.xlu0 %v2492
    %v2556 = vpop.xlane.xlu0 %2555
    %v2557 = vsub.f32 %v2461, %v2494
    %v2558 = vsub.f32 %v2462, %v2496
    %v2559 = vsub.f32 %v2463, %v2498
    %v2560 = vsub.f32 %v2464, %v2500
    %v2561 = vsub.f32 %v2465, %v2502
    %v2562 = vsub.f32 %v2466, %v2504
    %v2563 = vsub.f32 %v2467, %v2506
    %v2564 = vsub.f32 %v2468, %v2508
    %v2565 = vsub.f32 %v2469, %v2510
    %v2566 = vsub.f32 %v2470, %v2512
    %v2567 = vsub.f32 %v2471, %v2514
    %v2568 = vsub.f32 %v2472, %v2516
    %v2569 = vsub.f32 %v2473, %v2518
    %v2570 = vsub.f32 %v2474, %v2520
    %v2571 = vsub.f32 %v2475, %v2522
    %v2572 = vsub.f32 %v2476, %v2524
    %v2573 = vsub.f32 %v2477, %v2526
    %v2574 = vsub.f32 %v2478, %v2528
    %v2575 = vsub.f32 %v2479, %v2530
    %v2576 = vsub.f32 %v2480, %v2532
    %v2577 = vsub.f32 %v2481, %v2534
    %v2578 = vsub.f32 %v2482, %v2536
    %v2579 = vsub.f32 %v2483, %v2538
    %v2580 = vsub.f32 %v2484, %v2540
    %v2581 = vsub.f32 %v2485, %v2542
    %v2582 = vsub.f32 %v2486, %v2544
    %v2583 = vsub.f32 %v2487, %v2546
    %v2584 = vsub.f32 %v2488, %v2548
    %v2585 = vsub.f32 %v2489, %v2550
    %v2586 = vsub.f32 %v2490, %v2552
    %v2587 = vsub.f32 %v2491, %v2554
    %v2588 = vsub.f32 %v2492, %v2556
    %v2589 = vmul.f32 %v2557, 1.442695
    %v2590 = vpow.pop %v2589
    %v2591 = vmul.f32 %v2558, 1.442695
    %v2592 = vpow.pop %v2591
    %v2593 = vmul.f32 %v2559, 1.442695
    %v2594 = vpow.pop %v2593
    %v2595 = vmul.f32 %v2560, 1.442695
    %v2596 = vpow.pop %v2595
    %v2597 = vmul.f32 %v2561, 1.442695
    %v2598 = vpow.pop %v2597
    %v2599 = vmul.f32 %v2562, 1.442695
    %v2600 = vpow.pop %v2599
    %v2601 = vmul.f32 %v2563, 1.442695
    %v2602 = vpow.pop %v2601
    %v2603 = vmul.f32 %v2564, 1.442695
    %v2604 = vpow.pop %v2603
    %v2605 = vmul.f32 %v2565, 1.442695
    %v2606 = vpow.pop %v2605
    %v2607 = vmul.f32 %v2566, 1.442695
    %v2608 = vpow.pop %v2607
    %v2609 = vmul.f32 %v2567, 1.442695
    %v2610 = vpow.pop %v2609
    %v2611 = vmul.f32 %v2568, 1.442695
    %v2612 = vpow.pop %v2611
    %v2613 = vmul.f32 %v2569, 1.442695
    %v2614 = vpow.pop %v2613
    %v2615 = vmul.f32 %v2570, 1.442695
    %v2616 = vpow.pop %v2615
    %v2617 = vmul.f32 %v2571, 1.442695
    %v2618 = vpow.pop %v2617
    %v2619 = vmul.f32 %v2572, 1.442695
    %v2620 = vpow.pop %v2619
    %v2621 = vmul.f32 %v2573, 1.442695
    %v2622 = vpow.pop %v2621
    %v2623 = vmul.f32 %v2574, 1.442695
    %v2624 = vpow.pop %v2623
    %v2625 = vmul.f32 %v2575, 1.442695
    %v2626 = vpow.pop %v2625
    %v2627 = vmul.f32 %v2576, 1.442695
    %v2628 = vpow.pop %v2627
    %v2629 = vmul.f32 %v2577, 1.442695
    %v2630 = vpow.pop %v2629
    %v2631 = vmul.f32 %v2578, 1.442695
    %v2632 = vpow.pop %v2631
    %v2633 = vmul.f32 %v2579, 1.442695
    %v2634 = vpow.pop %v2633
    %v2635 = vmul.f32 %v2580, 1.442695
    %v2636 = vpow.pop %v2635
    %v2637 = vmul.f32 %v2581, 1.442695
    %v2638 = vpow.pop %v2637
    %v2639 = vmul.f32 %v2582, 1.442695
    %v2640 = vpow.pop %v2639
    %v2641 = vmul.f32 %v2583, 1.442695
    %v2642 = vpow.pop %v2641
    %v2643 = vmul.f32 %v2584, 1.442695
    %v2644 = vpow.pop %v2643
    %v2645 = vmul.f32 %v2585, 1.442695
    %v2646 = vpow.pop %v2645
    %v2647 = vmul.f32 %v2586, 1.442695
    %v2648 = vpow.pop %v2647
    %v2649 = vmul.f32 %v2587, 1.442695
    %v2650 = vpow.pop %v2649
    %v2651 = vmul.f32 %v2588, 1.442695
    %v2652 = vpow.pop %v2651
    %2653 = vadd.xlane.f32.xlu0 %v2590
    %v2654 = vpop.xlane.xlu0 %2653
    %2655 = vadd.xlane.f32.xlu0 %v2592
    %v2656 = vpop.xlane.xlu0 %2655
    %2657 = vadd.xlane.f32.xlu0 %v2594
    %v2658 = vpop.xlane.xlu0 %2657
    %2659 = vadd.xlane.f32.xlu0 %v2596
    %v2660 = vpop.xlane.xlu0 %2659
    %2661 = vadd.xlane.f32.xlu0 %v2598
    %v2662 = vpop.xlane.xlu0 %2661
    %2663 = vadd.xlane.f32.xlu0 %v2600
    %v2664 = vpop.xlane.xlu0 %2663
    %2665 = vadd.xlane.f32.xlu0 %v2602
    %v2666 = vpop.xlane.xlu0 %2665
    %2667 = vadd.xlane.f32.xlu0 %v2604
    %v2668 = vpop.xlane.xlu0 %2667
    %2669 = vadd.xlane.f32.xlu0 %v2606
    %v2670 = vpop.xlane.xlu0 %2669
    %2671 = vadd.xlane.f32.xlu0 %v2608
    %v2672 = vpop.xlane.xlu0 %2671
    %2673 = vadd.xlane.f32.xlu0 %v2610
    %v2674 = vpop.xlane.xlu0 %2673
    %2675 = vadd.xlane.f32.xlu0 %v2612
    %v2676 = vpop.xlane.xlu0 %2675
    %2677 = vadd.xlane.f32.xlu0 %v2614
    %v2678 = vpop.xlane.xlu0 %2677
    %2679 = vadd.xlane.f32.xlu0 %v2616
    %v2680 = vpop.xlane.xlu0 %2679
    %2681 = vadd.xlane.f32.xlu0 %v2618
    %v2682 = vpop.xlane.xlu0 %2681
    %2683 = vadd.xlane.f32.xlu0 %v2620
    %v2684 = vpop.xlane.xlu0 %2683
    %2685 = vadd.xlane.f32.xlu0 %v2622
    %v2686 = vpop.xlane.xlu0 %2685
    %2687 = vadd.xlane.f32.xlu0 %v2624
    %v2688 = vpop.xlane.xlu0 %2687
    %2689 = vadd.xlane.f32.xlu0 %v2626
    %v2690 = vpop.xlane.xlu0 %2689
    %2691 = vadd.xlane.f32.xlu0 %v2628
    %v2692 = vpop.xlane.xlu0 %2691
    %2693 = vadd.xlane.f32.xlu0 %v2630
    %v2694 = vpop.xlane.xlu0 %2693
    %2695 = vadd.xlane.f32.xlu0 %v2632
    %v2696 = vpop.xlane.xlu0 %2695
    %2697 = vadd.xlane.f32.xlu0 %v2634
    %v2698 = vpop.xlane.xlu0 %2697
    %2699 = vadd.xlane.f32.xlu0 %v2636
    %v2700 = vpop.xlane.xlu0 %2699
    %2701 = vadd.xlane.f32.xlu0 %v2638
    %v2702 = vpop.xlane.xlu0 %2701
    %2703 = vadd.xlane.f32.xlu0 %v2640
    %v2704 = vpop.xlane.xlu0 %2703
    %2705 = vadd.xlane.f32.xlu0 %v2642
    %v2706 = vpop.xlane.xlu0 %2705
    %2707 = vadd.xlane.f32.xlu0 %v2644
    %v2708 = vpop.xlane.xlu0 %2707
    %2709 = vadd.xlane.f32.xlu0 %v2646
    %v2710 = vpop.xlane.xlu0 %2709
    %2711 = vadd.xlane.f32.xlu0 %v2648
    %v2712 = vpop.xlane.xlu0 %2711
    %2713 = vadd.xlane.f32.xlu0 %v2650
    %v2714 = vpop.xlane.xlu0 %2713
    %2715 = vadd.xlane.f32.xlu0 %v2652
    %v2716 = vpop.xlane.xlu0 %2715
    %v2717 = vlog2.pop %v2654
    %v2718 = vmul.f32 %v2717, 0.6931472
    %v2719 = vlog2.pop %v2656
    %v2720 = vmul.f32 %v2719, 0.6931472
    %v2721 = vlog2.pop %v2658
    %v2722 = vmul.f32 %v2721, 0.6931472
    %v2723 = vlog2.pop %v2660
    %v2724 = vmul.f32 %v2723, 0.6931472
    %v2725 = vlog2.pop %v2662
    %v2726 = vmul.f32 %v2725, 0.6931472
    %v2727 = vlog2.pop %v2664
    %v2728 = vmul.f32 %v2727, 0.6931472
    %v2729 = vlog2.pop %v2666
    %v2730 = vmul.f32 %v2729, 0.6931472
    %v2731 = vlog2.pop %v2668
    %v2732 = vmul.f32 %v2731, 0.6931472
    %v2733 = vlog2.pop %v2670
    %v2734 = vmul.f32 %v2733, 0.6931472
    %v2735 = vlog2.pop %v2672
    %v2736 = vmul.f32 %v2735, 0.6931472
    %v2737 = vlog2.pop %v2674
    %v2738 = vmul.f32 %v2737, 0.6931472
    %v2739 = vlog2.pop %v2676
    %v2740 = vmul.f32 %v2739, 0.6931472
    %v2741 = vlog2.pop %v2678
    %v2742 = vmul.f32 %v2741, 0.6931472
    %v2743 = vlog2.pop %v2680
    %v2744 = vmul.f32 %v2743, 0.6931472
    %v2745 = vlog2.pop %v2682
    %v2746 = vmul.f32 %v2745, 0.6931472
    %v2747 = vlog2.pop %v2684
    %v2748 = vmul.f32 %v2747, 0.6931472
    %v2749 = vlog2.pop %v2686
    %v2750 = vmul.f32 %v2749, 0.6931472
    %v2751 = vlog2.pop %v2688
    %v2752 = vmul.f32 %v2751, 0.6931472
    %v2753 = vlog2.pop %v2690
    %v2754 = vmul.f32 %v2753, 0.6931472
    %v2755 = vlog2.pop %v2692
    %v2756 = vmul.f32 %v2755, 0.6931472
    %v2757 = vlog2.pop %v2694
    %v2758 = vmul.f32 %v2757, 0.6931472
    %v2759 = vlog2.pop %v2696
    %v2760 = vmul.f32 %v2759, 0.6931472
    %v2761 = vlog2.pop %v2698
    %v2762 = vmul.f32 %v2761, 0.6931472
    %v2763 = vlog2.pop %v2700
    %v2764 = vmul.f32 %v2763, 0.6931472
    %v2765 = vlog2.pop %v2702
    %v2766 = vmul.f32 %v2765, 0.6931472
    %v2767 = vlog2.pop %v2704
    %v2768 = vmul.f32 %v2767, 0.6931472
    %v2769 = vlog2.pop %v2706
    %v2770 = vmul.f32 %v2769, 0.6931472
    %v2771 = vlog2.pop %v2708
    %v2772 = vmul.f32 %v2771, 0.6931472
    %v2773 = vlog2.pop %v2710
    %v2774 = vmul.f32 %v2773, 0.6931472
    %v2775 = vlog2.pop %v2712
    %v2776 = vmul.f32 %v2775, 0.6931472
    %v2777 = vlog2.pop %v2714
    %v2778 = vmul.f32 %v2777, 0.6931472
    %v2779 = vlog2.pop %v2716
    %v2780 = vmul.f32 %v2779, 0.6931472
    %v2781 = vsub.f32 %v2557, %v2718
    %v2782 = vsub.f32 %v2558, %v2720
    %v2783 = vsub.f32 %v2559, %v2722
    %v2784 = vsub.f32 %v2560, %v2724
    %v2785 = vsub.f32 %v2561, %v2726
    %v2786 = vsub.f32 %v2562, %v2728
    %v2787 = vsub.f32 %v2563, %v2730
    %v2788 = vsub.f32 %v2564, %v2732
    %v2789 = vsub.f32 %v2565, %v2734
    %v2790 = vsub.f32 %v2566, %v2736
    %v2791 = vsub.f32 %v2567, %v2738
    %v2792 = vsub.f32 %v2568, %v2740
    %v2793 = vsub.f32 %v2569, %v2742
    %v2794 = vsub.f32 %v2570, %v2744
    %v2795 = vsub.f32 %v2571, %v2746
    %v2796 = vsub.f32 %v2572, %v2748
    %v2797 = vsub.f32 %v2573, %v2750
    %v2798 = vsub.f32 %v2574, %v2752
    %v2799 = vsub.f32 %v2575, %v2754
    %v2800 = vsub.f32 %v2576, %v2756
    %v2801 = vsub.f32 %v2577, %v2758
    %v2802 = vsub.f32 %v2578, %v2760
    %v2803 = vsub.f32 %v2579, %v2762
    %v2804 = vsub.f32 %v2580, %v2764
    %v2805 = vsub.f32 %v2581, %v2766
    %v2806 = vsub.f32 %v2582, %v2768
    %v2807 = vsub.f32 %v2583, %v2770
    %v2808 = vsub.f32 %v2584, %v2772
    %v2809 = vsub.f32 %v2585, %v2774
    %v2810 = vsub.f32 %v2586, %v2776
    %v2811 = vsub.f32 %v2587, %v2778
    %v2812 = vsub.f32 %v2588, %v2780
    %v2813 = vpack.c.bf16 %v2782, %v2781
    %v2814 = vpack.c.bf16 %v2784, %v2783
    %v2815 = vpack.c.bf16 %v2786, %v2785
    %v2816 = vpack.c.bf16 %v2788, %v2787
    %v2817 = vpack.c.bf16 %v2790, %v2789
    %v2818 = vpack.c.bf16 %v2792, %v2791
    %v2819 = vpack.c.bf16 %v2794, %v2793
    %v2820 = vpack.c.bf16 %v2796, %v2795
    %v2821 = vpack.c.bf16 %v2798, %v2797
    %v2822 = vpack.c.bf16 %v2800, %v2799
    %v2823 = vpack.c.bf16 %v2802, %v2801
    %v2824 = vpack.c.bf16 %v2804, %v2803
    %v2825 = vpack.c.bf16 %v2806, %v2805
    %v2826 = vpack.c.bf16 %v2808, %v2807
    %v2827 = vpack.c.bf16 %v2810, %v2809
    %v2828 = vpack.c.bf16 %v2812, %v2811
    %v2845 = vunpack.c.l.b16 %v2813
    %v2846 = vunpack.c.h.b16 %v2813
    %v2847 = vunpack.c.l.b16 %v2814
    %v2848 = vunpack.c.h.b16 %v2814
    %v2849 = vunpack.c.l.b16 %v2815
    %v2850 = vunpack.c.h.b16 %v2815
    %v2851 = vunpack.c.l.b16 %v2816
    %v2852 = vunpack.c.h.b16 %v2816
    %v2853 = vunpack.c.l.b16 %v2817
    %v2854 = vunpack.c.h.b16 %v2817
    %v2855 = vunpack.c.l.b16 %v2818
    %v2856 = vunpack.c.h.b16 %v2818
    %v2857 = vunpack.c.l.b16 %v2819
    %v2858 = vunpack.c.h.b16 %v2819
    %v2859 = vunpack.c.l.b16 %v2820
    %v2860 = vunpack.c.h.b16 %v2820
    %v2861 = vunpack.c.l.b16 %v2821
    %v2862 = vunpack.c.h.b16 %v2821
    %v2863 = vunpack.c.l.b16 %v2822
    %v2864 = vunpack.c.h.b16 %v2822
    %v2865 = vunpack.c.l.b16 %v2823
    %v2866 = vunpack.c.h.b16 %v2823
    %v2867 = vunpack.c.l.b16 %v2824
    %v2868 = vunpack.c.h.b16 %v2824
    %v2869 = vunpack.c.l.b16 %v2825
    %v2870 = vunpack.c.h.b16 %v2825
    %v2871 = vunpack.c.l.b16 %v2826
    %v2872 = vunpack.c.h.b16 %v2826
    %v2873 = vunpack.c.l.b16 %v2827
    %v2874 = vunpack.c.h.b16 %v2827
    %v2875 = vunpack.c.l.b16 %v2828
    %v2876 = vunpack.c.h.b16 %v2828
    %v2877 = vpack.c.b16 %v2845, %v2845
    %v2878 = vpack.c.b16 %v2846, %v2846
    %v2879 = vpack.c.b16 %v2847, %v2847
    %v2880 = vpack.c.b16 %v2848, %v2848
    %v2881 = vpack.c.b16 %v2849, %v2849
    %v2882 = vpack.c.b16 %v2850, %v2850
    %v2883 = vpack.c.b16 %v2851, %v2851
    %v2884 = vpack.c.b16 %v2852, %v2852
    %v2885 = vpack.c.b16 %v2853, %v2853
    %v2886 = vpack.c.b16 %v2854, %v2854
    %v2887 = vpack.c.b16 %v2855, %v2855
    %v2888 = vpack.c.b16 %v2856, %v2856
    %v2889 = vpack.c.b16 %v2857, %v2857
    %v2890 = vpack.c.b16 %v2858, %v2858
    %v2891 = vpack.c.b16 %v2859, %v2859
    %v2892 = vpack.c.b16 %v2860, %v2860
    %v2893 = vpack.c.b16 %v2861, %v2861
    %v2894 = vpack.c.b16 %v2862, %v2862
    %v2895 = vpack.c.b16 %v2863, %v2863
    %v2896 = vpack.c.b16 %v2864, %v2864
    %v2897 = vpack.c.b16 %v2865, %v2865
    %v2898 = vpack.c.b16 %v2866, %v2866
    %v2899 = vpack.c.b16 %v2867, %v2867
    %v2900 = vpack.c.b16 %v2868, %v2868
    %v2901 = vpack.c.b16 %v2869, %v2869
    %v2902 = vpack.c.b16 %v2870, %v2870
    %v2903 = vpack.c.b16 %v2871, %v2871
    %v2904 = vpack.c.b16 %v2872, %v2872
    %v2905 = vpack.c.b16 %v2873, %v2873
    %v2906 = vpack.c.b16 %v2874, %v2874
    %v2907 = vpack.c.b16 %v2875, %v2875
    %v2908 = vpack.c.b16 %v2876, %v2876
    %2941 = vst [vmem:[#allocation11] sm:$0xf] %v2877
    %2942 = vst [vmem:[#allocation11 + $0x4] sm:$0xf] %v2878
    %2943 = vst [vmem:[#allocation11 + $0x8] sm:$0xf] %v2879
    %2944 = vst [vmem:[#allocation11 + $0xc] sm:$0xf] %v2880
    %2945 = vst [vmem:[#allocation11 + $0x10] sm:$0xf] %v2881
    %2946 = vst [vmem:[#allocation11 + $0x14] sm:$0xf] %v2882
    %2947 = vst [vmem:[#allocation11 + $0x18] sm:$0xf] %v2883
    %2948 = vst [vmem:[#allocation11 + $0x1c] sm:$0xf] %v2884
    %2949 = vst [vmem:[#allocation11 + $0x20] sm:$0xf] %v2885
    %2950 = vst [vmem:[#allocation11 + $0x24] sm:$0xf] %v2886
    %2951 = vst [vmem:[#allocation11 + $0x28] sm:$0xf] %v2887
    %2952 = vst [vmem:[#allocation11 + $0x2c] sm:$0xf] %v2888
    %2953 = vst [vmem:[#allocation11 + $0x30] sm:$0xf] %v2889
    %2954 = vst [vmem:[#allocation11 + $0x34] sm:$0xf] %v2890
    %2955 = vst [vmem:[#allocation11 + $0x38] sm:$0xf] %v2891
    %2956 = vst [vmem:[#allocation11 + $0x3c] sm:$0xf] %v2892
    %2957 = vst [vmem:[#allocation11 + $0x40] sm:$0xf] %v2893
    %2958 = vst [vmem:[#allocation11 + $0x44] sm:$0xf] %v2894
    %2959 = vst [vmem:[#allocation11 + $0x48] sm:$0xf] %v2895
    %2960 = vst [vmem:[#allocation11 + $0x4c] sm:$0xf] %v2896
    %2961 = vst [vmem:[#allocation11 + $0x50] sm:$0xf] %v2897
    %2962 = vst [vmem:[#allocation11 + $0x54] sm:$0xf] %v2898
    %2963 = vst [vmem:[#allocation11 + $0x58] sm:$0xf] %v2899
    %2964 = vst [vmem:[#allocation11 + $0x5c] sm:$0xf] %v2900
    %2965 = vst [vmem:[#allocation11 + $0x60] sm:$0xf] %v2901
    %2966 = vst [vmem:[#allocation11 + $0x64] sm:$0xf] %v2902
    %2967 = vst [vmem:[#allocation11 + $0x68] sm:$0xf] %v2903
    %2968 = vst [vmem:[#allocation11 + $0x6c] sm:$0xf] %v2904
    %2969 = vst [vmem:[#allocation11 + $0x70] sm:$0xf] %v2905
    %2970 = vst [vmem:[#allocation11 + $0x74] sm:$0xf] %v2906
    %2971 = vst [vmem:[#allocation11 + $0x78] sm:$0xf] %v2907
    %2972 = vst [vmem:[#allocation11 + $0x7c] sm:$0xf] %v2908
    // Predicated region
    $region72: #{tpu_custom_call.1} parent=1 // pred_check
      _
    $region73: #{tpu_custom_call.1} parent=1 // pred_check_branch
      %2974 = sbr.rel (0) target = $region75
    $region74: #{tpu_custom_call.1} parent=1 // pred_region
      %s2976 = ssub.s32 2048, 2048
      %2977 = vsyncadd [#allocation8], %s2976
      %s2978 = sshll.u32 [#allocation11], 4
      %s2979 = int_to_ptr.vmem [resolvable:$true] %s2978
      %2984 = dma.vmem_to_hbm [thread:$0]  %s2979, 2048, %s8, [#allocation8], 64, 64, 4
    $region75: #{tpu_custom_call.1} parent=1 // pred_fallthru
      _
    // Predicated region
    $region76: #{tpu_custom_call.1} parent=1 // pred_check
      _
    $region77: #{tpu_custom_call.1} parent=1 // pred_check_branch
      %2986 = sbr.rel (0) target = $region79
    $region78: #{tpu_custom_call.1} parent=1 // pred_region
      %2987 = dma.done [#allocation8], 2048
    $region79: #{tpu_custom_call.1} parent=1 // pred_fallthru
      _
    %2988 = vsyncpa [#allocation7], 1
    %2989 = vsyncpa [#allocation10], 1
    %2990 = vsyncpa [#allocation8], 1
  %2991 = vsyncmov [#allocation5]
  %s2992 = vpop.sfrf %2991
  %p2993 = scmp.eq.s32.totalorder %s2992, 0
  %p2994 = pneg %p2993
  %2996 = shalt.err (%p2994)
  %s2997 = scalar_lea.sflag [#allocation5], 1
  %2998 = vsyncmov %s2997
  %s2999 = vpop.sfrf %2998
  %p3000 = scmp.eq.s32.totalorder %s2999, 0
  %p3001 = pneg %p3000
  %3003 = shalt.err (%p3001)

</llo_original>
